<compile_context>
chip_gen: v7x
topology: tpu7x:2x2x1
jax: 0.10.0
libtpu: 0.0.40
codegen_flags: <defaults>
</compile_context>

<pallas_src>
import numpy as np
import jax
import jax.numpy as jnp
from jax.experimental import pallas as pl
from jax.experimental.pallas import tpu as pltpu

F32 = jnp.float32
BF16 = jnp.bfloat16
STRIDE = 4
CONVS = ((3, 1), (3, 2), (3, 3), (1, 1))   # (kernel_size, dilation) of shot_crossX1..X4
LN_EPS = 1e-5


# ----------------------------------------------------------------------------
# Static geometry / constant matrices (computed once, at pack time)
# ----------------------------------------------------------------------------
def conv_geometry(shot_channel):
    """Geometry of the four Conv1d's over a length-`shot_channel` axis, stride 4."""
    metas, sel = [], []
    tap_off = q_off = 0
    for (K, d) in CONVS:
        assert shot_channel >= d * (K - 1) + 1, (
            f"shot_channel={shot_channel} too small for conv (K={K}, dilation={d})")
        l_out = (shot_channel - d * (K - 1) - 1) // STRIDE + 1
        metas.append((K, l_out, tap_off, q_off))
        for t in range(K):
            sel.extend(STRIDE * l + d * t for l in range(l_out))
        tap_off += K * l_out
        q_off += l_out
    return tuple(metas), np.asarray(sel, np.int64), tap_off, q_off


def adaptive_pool_matrix(l_in, l_out):
    """P [l_in, l_out] with x @ P == AdaptiveAvgPool1d(l_out) over a length-l_in axis."""
    P = np.zeros((l_in, l_out), np.float32)
    for j in range(l_out):
        s = (j * l_in) // l_out
        e = -(-((j + 1) * l_in) // l_out)          # ceil
        P[s:e, j] = 1.0 / (e - s)
    return P


def merge_pool_matrix(total_n, bf_size):
    """One-hot M [bf_size, total_n] replicating mergePooling() row expansion."""
    sc = bf_size // total_n
    M = np.zeros((bf_size, total_n), np.float32)
    for s in range(bf_size):
        j = total_n - 1 if sc == 0 else min(s // sc, total_n - 1)
        M[s, j] = 1.0
    return M


def _pack_rows(sections, row_align):
    """Row-stack 2-D arrays into one zero-padded slab; returns (slab, row_offsets)."""
    offs, r, w = [], 0, 0
    for a in sections:
        r = -(-r // row_align) * row_align
        offs.append(r)
        r += a.shape[0]
        w = max(w, a.shape[1])
    r = -(-r // row_align) * row_align
    w = -(-w // 128) * 128
    slab = np.zeros((r, w), np.float32)
    for o, a in zip(offs, sections):
        slab[o:o + a.shape[0], :a.shape[1]] = a
    return slab, tuple(offs)


# ----------------------------------------------------------------------------
# One-time parameter packing (transpose / tap gather / branch block-diagonal)
# ----------------------------------------------------------------------------
def pack_layer_params(raw, seq_len):
    """Returns (meta, weight_slab_bf16 [Rb, Wb], param_slab_f32 [Rf, Wf])."""
    C, E, sn = raw["shot_channel"], raw["input_channel"], raw["shot_num"]
    S = seq_len
    branch_ns = (sn, int(sn * 1.5), int(sn * 0.5))
    assert min(branch_ns) >= 1, "every multi-scale branch needs at least one shot"
    N = sum(branch_ns)
    conv_metas, sel, n_taps, l_cat = conv_geometry(C)
    TK = sum(K for K, _ in CONVS)

    w_up = np.asarray(raw["w_up"], np.float32)                    # [C, E] (torch layout)
    b_up = np.asarray(raw["b_up"], np.float32)                    # [C]
    wups = w_up.T[:, sel]                                         # [E, n_taps] tap-gathered
    bups = b_up[sel][None, :]                                     # [1, n_taps]

    # frame_to_shot_{1,2,3} pool matrices stacked:  z_all = pt_all @ fc_up(x)
    pt_all = np.concatenate(
        [adaptive_pool_matrix(S, n).T for n in branch_ns], axis=0)          # [N, S]

    # Conv1d weights, block-diagonal across branches, one [N, N] block per (conv, tap).
    wconv = np.zeros((N, TK * N), np.float32)
    bconv = np.zeros((N, len(CONVS)), np.float32)
    g = 0
    for ci, (K, _d) in enumerate(CONVS):
        r = 0
        for k, n_k in enumerate(branch_ns):
            wk = np.asarray(raw[f"convs{k + 1}"][ci]["w"], np.float32)      # [n_k, n_k, K]
            bconv[r:r + n_k, ci] = np.asarray(raw[f"convs{k + 1}"][ci]["b"], np.float32)
            for t in range(K):
                col = (g + t) * N + r
                wconv[r:r + n_k, col:col + n_k] = wk[:, :, t]
            r += n_k
        g += K

    Q = adaptive_pool_matrix(l_cat, C)                                      # [l_cat, C]

    # fc_down_{1,2,3}: weights side by side, per-row bias/LN params, branch-select mask.
    wd = np.zeros((C, 3 * E), np.float32)
    bd = np.zeros((N, E), np.float32)
    gam = np.zeros((N, E), np.float32)
    bet = np.zeros((N, E), np.float32)
    msk = np.zeros((N, 3), np.float32)
    r = 0
    for k, n_k in enumerate(branch_ns):
        fd = raw[f"fc_down{k + 1}"]
        wd[:, k * E:(k + 1) * E] = np.asarray(fd["w"], np.float32).T
        bd[r:r + n_k, :] = np.asarray(fd["b"], np.float32)[None, :]
        gam[r:r + n_k, :] = np.asarray(fd["gamma"], np.float32)[None, :]
        bet[r:r + n_k, :] = np.asarray(fd["beta"], np.float32)[None, :]
        msk[r:r + n_k, k] = 1.0
        r += n_k

    M = merge_pool_matrix(N, S)                                             # [S, N]

    wb_slab, wb_offs = _pack_rows([wups, pt_all, wconv, Q, wd, M], row_align=16)
    fp_slab, fp_offs = _pack_rows([bd, gam, bet, bconv, msk, bups], row_align=8)

    meta = dict(S=S, E=E, C=C, N=N, branch_ns=branch_ns, n_taps=n_taps,
                l_cat=l_cat, TK=TK, conv_metas=conv_metas,
                wb_offs=wb_offs, fp_offs=fp_offs,
                wb_shape=wb_slab.shape, fp_shape=fp_slab.shape)
    return meta, jnp.asarray(wb_slab, BF16), jnp.asarray(fp_slab, F32)


# ----------------------------------------------------------------------------
# Fused multi-layer Pallas kernel (one grid step = one extraction layer)
# ----------------------------------------------------------------------------
def _make_group_kernel(meta):
    S, E, C, N = meta["S"], meta["E"], meta["C"], meta["N"]
    n_taps, l_cat, TK = meta["n_taps"], meta["l_cat"], meta["TK"]
    conv_metas = meta["conv_metas"]
    o_wup, o_pt, o_wcv, o_q, o_wd, o_m = meta["wb_offs"]
    o_bd, o_gam, o_bet, o_bcv, o_msk, o_bup = meta["fp_offs"]

    def kernel(x_ref, wb_ref, fp_ref, o_ref):
        # Layer 0 seeds the VMEM-resident activation accumulator from x.
        @pl.when(pl.program_id(0) == 0)
        def _():
            o_ref[...] = x_ref[...]

        x0 = o_ref[...]                                                   # [S, E] f32

        # Static row-slices of the two packed slabs.
        wups = wb_ref[o_wup:o_wup + E, 0:n_taps]                          # bf16
        pt = wb_ref[o_pt:o_pt + N, 0:S]
        wcv = wb_ref[o_wcv:o_wcv + N, 0:TK * N]
        Q = wb_ref[o_q:o_q + l_cat, 0:C]
        wd = wb_ref[o_wd:o_wd + C, 0:3 * E]
        M = wb_ref[o_m:o_m + S, 0:N]

        bd = fp_ref[o_bd:o_bd + N, 0:E]                                   # f32
        gam = fp_ref[o_gam:o_gam + N, 0:E]
        bet = fp_ref[o_bet:o_bet + N, 0:E]
        bcv = fp_ref[o_bcv:o_bcv + N, 0:len(CONVS)]
        msk = fp_ref[o_msk:o_msk + N, 0:3]
        bup = fp_ref[o_bup:o_bup + 1, 0:n_taps]

        # fc_up_shot fused with the conv im2col tap gather:
        #   ytaps[s, col] == fc_up(x0)[s, src(col)]
        ytaps = jnp.dot(x0.astype(BF16), wups,
                        preferred_element_type=jnp.float32) + bup          # [S, n_taps]

        # frame_to_shot_{1,2,3}: one contraction over S for all 3 branches.
        ztaps = jnp.dot(pt, ytaps.astype(BF16),
                        preferred_element_type=jnp.float32)                # [N, n_taps]
        ztb = ztaps.astype(BF16)

        # 4 dilated/strided Conv1d + ReLU (branches block-diagonal), followed by
        # self.pool accumulated per conv so the dim=2 concat never materializes.
        pooled = jnp.zeros((N, C), jnp.float32)
        g = 0
        for ci, (K, l_out, toff, qoff) in enumerate(conv_metas):
            acc = None
            for t in range(K):
                w_t = wcv[:, (g + t) * N:(g + t + 1) * N]                  # [N, N] bf16
                tap = ztb[:, toff + t * l_out: toff + (t + 1) * l_out]     # [N, l_out]
                y = jnp.dot(w_t, tap, preferred_element_type=jnp.float32)
                acc = y if acc is None else acc + y
            u = jnp.maximum(acc + bcv[:, ci:ci + 1], 0.0)                  # conv+bias+ReLU
            pooled = pooled + jnp.dot(u.astype(BF16), Q[qoff:qoff + l_out, :],
                                      preferred_element_type=jnp.float32)
            g += K

        # fc_down_{1,2,3} in ONE matmul ([N, C] @ [C, 3E]); pick each branch's
        # column block with a per-row mask (no concatenation needed).
        h_all = jnp.dot(pooled.astype(BF16), wd,
                        preferred_element_type=jnp.float32)                # [N, 3E]
        h = (h_all[:, 0:E] * msk[:, 0:1]
             + h_all[:, E:2 * E] * msk[:, 1:2]
             + h_all[:, 2 * E:3 * E] * msk[:, 2:3])
        h = jnp.maximum(h + bd, 0.0)

        # LayerNorm(input_channel) in f32 (biased variance, eps inside rsqrt).
        mu = jnp.mean(h, axis=-1, keepdims=True)
        var = jnp.mean((h - mu) ** 2, axis=-1, keepdims=True)
        d = (h - mu) * jax.lax.rsqrt(var + LN_EPS) * gam + bet             # [N, E]

        # mergePooling (one-hot row replication) + residual; the result stays in
        # the output VMEM block and feeds the next layer (next grid step).
        o_ref[...] = x0 + jnp.dot(M, d.astype(BF16),
                                  preferred_element_type=jnp.float32)

    return kernel


def _group_forward(meta, wb, fp, x0):
    """Run wb.shape[0] consecutive layers (identical geometry) in one pallas_call."""
    n_layers = wb.shape[0]
    S, E = meta["S"], meta["E"]
    Rb, Wb = meta["wb_shape"]
    Rf, Wf = meta["fp_shape"]
    return pl.pallas_call(
        _make_group_kernel(meta),
        out_shape=jax.ShapeDtypeStruct((S, E), F32),
        grid=(n_layers,),
        in_specs=[
            pl.BlockSpec((S, E), lambda l: (0, 0)),             # activation (read once)
            pl.BlockSpec((None, Rb, Wb), lambda l: (l, 0, 0)),  # layer-l bf16 weight slab
            pl.BlockSpec((None, Rf, Wf), lambda l: (l, 0, 0)),  # layer-l f32 param slab
        ],
        out_specs=pl.BlockSpec((S, E), lambda l: (0, 0)),       # VMEM-resident accumulator
        input_output_aliases={0: 0},
        compiler_params=pltpu.CompilerParams(
            dimension_semantics=("arbitrary",),
            vmem_limit_bytes=64 * 1024 * 1024),
    )(x0, wb, fp)


def make_encoder_forward(packed_layers):
    """Group consecutive layers with identical static geometry into fused calls."""
    groups = []
    for meta, wb, fp in packed_layers:
        if groups and groups[-1][0] == meta:
            groups[-1][1].append(wb)
            groups[-1][2].append(fp)
        else:
            groups.append([meta, [wb], [fp]])
    metas = [g[0] for g in groups]
    slabs = [(jnp.stack(g[1]), jnp.stack(g[2])) for g in groups]

    @jax.jit
    def forward(slabs, x):
        x0 = x[0]                                   # module assumes batch == 1
        for meta, (wb, fp) in zip(metas, slabs):
            x0 = _group_forward(meta, wb, fp, x0)
        return x0[None]

    return forward, slabs


# ----------------------------------------------------------------------------
# Parameter init (synthetic, PyTorch layout)
# ----------------------------------------------------------------------------
def init_extraction_params(key, shot_num, shot_channel, input_channel):
    keys = iter(jax.random.split(key, 64))

    def w(shape, scale=0.05):
        return scale * jax.random.normal(next(keys), shape, dtype=F32)

    p = {
        "shot_num": shot_num,
        "shot_channel": shot_channel,
        "input_channel": input_channel,
        "w_up": w((shot_channel, input_channel)),   # torch Linear weight [out, in]
        "b_up": w((shot_channel,)),
    }
    branch_ns = (shot_num, int(shot_num * 1.5), int(shot_num * 0.5))
    for bi, n in zip((1, 2, 3), branch_ns):
        p[f"convs{bi}"] = [{"w": w((n, n, K)), "b": w((n,))} for (K, _d) in CONVS]
        p[f"fc_down{bi}"] = {
            "w": w((input_channel, shot_channel)),
            "b": w((input_channel,)),
            "gamma": jnp.ones((input_channel,), F32),
            "beta": jnp.zeros((input_channel,), F32),
        }
    return p


# ----------------------------------------------------------------------------
if __name__ == "__main__":
    layer_nums = 2
    shot_num = 4
    shot_channel = [64, 64]
    input_channel = 32
    seq_len = 16
    assert layer_nums == len(shot_channel)

    key = jax.random.PRNGKey(0)
    kx, kp = jax.random.split(key)
    x = jax.random.normal(kx, (1, seq_len, input_channel), dtype=F32)

    packed_layers = [
        pack_layer_params(
            init_extraction_params(jax.random.fold_in(kp, i), shot_num,
                                   shot_channel[i], input_channel),
            seq_len)
        for i in range(layer_nums)
    ]
    forward, slabs = make_encoder_forward(packed_layers)

    out = jax.block_until_ready(forward(slabs, x))
    assert out.shape == (1, seq_len, input_channel), out.shape
    assert bool(jnp.all(jnp.isfinite(out)))
    print("KERNEL_OK")
</pallas_src>

<mosaic_0001>
module attributes {stable_mosaic.version = 11 : i64} {
  func.func @kernel(%arg0: i32, %arg1: memref<16x32xf32, #tpu.memory_space<vmem>>, %arg2: memref<1x208x256xbf16, #tpu.memory_space<vmem>>, %arg3: memref<1x88x256xf32, #tpu.memory_space<vmem>>, %arg4: memref<16x32xf32, #tpu.memory_space<vmem>>) attributes {dimension_semantics = [#tpu.dimension_semantics<arbitrary>], iteration_bounds = array<i64: 2>, scalar_prefetch = 0 : i64, scratch_operands = 0 : i64, tpu.core_type = #tpu.core_type<tc>, window_params = [{pipeline_mode = #tpu.pipeline_mode<synchronous>, transform_indices = @transform_0, window_bounds = array<i64: 16, 32>}, {transform_indices = @transform_1, window_bounds = array<i64: 1, 208, 256>}, {transform_indices = @transform_2, window_bounds = array<i64: 1, 88, 256>}, {pipeline_mode = #tpu.pipeline_mode<synchronous>, transform_indices = @transform_3, window_bounds = array<i64: 16, 32>}]} {
    %c0_i32 = arith.constant 0 : i32
    %0 = arith.cmpi eq, %arg0, %c0_i32 : i32
    %1 = arith.extui %0 : i1 to i32
    %c0_i32_0 = arith.constant 0 : i32
    %2 = arith.cmpi ne, %1, %c0_i32_0 : i32
    scf.if %2 {
      %c0_61 = arith.constant 0 : index
      %c0_62 = arith.constant 0 : index
      %151 = vector.load %arg1[%c0_61, %c0_62] : memref<16x32xf32, #tpu.memory_space<vmem>>, vector<16x32xf32>
      %c0_63 = arith.constant 0 : index
      %c0_64 = arith.constant 0 : index
      %152 = vector.load %arg4[%c0_63, %c0_64] : memref<16x32xf32, #tpu.memory_space<vmem>>, vector<16x32xf32>
      tpu.vector_store %arg4[%c0_63, %c0_64], %151 {strides = array<i32>} : memref<16x32xf32, #tpu.memory_space<vmem>>, vector<16x32xf32>,
    } else {
    }
    %c0 = arith.constant 0 : index
    %c0_1 = arith.constant 0 : index
    %3 = vector.load %arg4[%c0, %c0_1] : memref<16x32xf32, #tpu.memory_space<vmem>>, vector<16x32xf32>
    %c0_2 = arith.constant 0 : index
    %c0_3 = arith.constant 0 : index
    %c0_4 = arith.constant 0 : index
    %4 = vector.load %arg2[%c0_2, %c0_3, %c0_4] : memref<1x208x256xbf16, #tpu.memory_space<vmem>>, vector<1x32x154xbf16>
    %5 = vector.shape_cast %4 : vector<1x32x154xbf16> to vector<32x154xbf16>
    %c0_5 = arith.constant 0 : index
    %c32 = arith.constant 32 : index
    %c0_6 = arith.constant 0 : index
    %6 = vector.load %arg2[%c0_5, %c32, %c0_6] : memref<1x208x256xbf16, #tpu.memory_space<vmem>>, vector<1x12x16xbf16>
    %7 = vector.shape_cast %6 : vector<1x12x16xbf16> to vector<12x16xbf16>
    %c0_7 = arith.constant 0 : index
    %c48 = arith.constant 48 : index
    %c0_8 = arith.constant 0 : index
    %8 = vector.load %arg2[%c0_7, %c48, %c0_8] : memref<1x208x256xbf16, #tpu.memory_space<vmem>>, vector<1x12x120xbf16>
    %9 = vector.shape_cast %8 : vector<1x12x120xbf16> to vector<12x120xbf16>
    %c0_9 = arith.constant 0 : index
    %c64 = arith.constant 64 : index
    %c0_10 = arith.constant 0 : index
    %10 = vector.load %arg2[%c0_9, %c64, %c0_10] : memref<1x208x256xbf16, #tpu.memory_space<vmem>>, vector<1x62x64xbf16>
    %11 = vector.shape_cast %10 : vector<1x62x64xbf16> to vector<62x64xbf16>
    %c0_11 = arith.constant 0 : index
    %c128 = arith.constant 128 : index
    %c0_12 = arith.constant 0 : index
    %12 = vector.load %arg2[%c0_11, %c128, %c0_12] : memref<1x208x256xbf16, #tpu.memory_space<vmem>>, vector<1x64x96xbf16>
    %13 = vector.shape_cast %12 : vector<1x64x96xbf16> to vector<64x96xbf16>
    %c0_13 = arith.constant 0 : index
    %c192 = arith.constant 192 : index
    %c0_14 = arith.constant 0 : index
    %14 = vector.load %arg2[%c0_13, %c192, %c0_14] : memref<1x208x256xbf16, #tpu.memory_space<vmem>>, vector<1x16x12xbf16>
    %15 = vector.shape_cast %14 : vector<1x16x12xbf16> to vector<16x12xbf16>
    %c0_15 = arith.constant 0 : index
    %c0_16 = arith.constant 0 : index
    %c0_17 = arith.constant 0 : index
    %16 = vector.load %arg3[%c0_15, %c0_16, %c0_17] : memref<1x88x256xf32, #tpu.memory_space<vmem>>, vector<1x12x32xf32>
    %17 = vector.shape_cast %16 : vector<1x12x32xf32> to vector<12x32xf32>
    %c0_18 = arith.constant 0 : index
    %c16 = arith.constant 16 : index
    %c0_19 = arith.constant 0 : index
    %18 = vector.load %arg3[%c0_18, %c16, %c0_19] : memref<1x88x256xf32, #tpu.memory_space<vmem>>, vector<1x12x32xf32>
    %19 = vector.shape_cast %18 : vector<1x12x32xf32> to vector<12x32xf32>
    %c0_20 = arith.constant 0 : index
    %c32_21 = arith.constant 32 : index
    %c0_22 = arith.constant 0 : index
    %20 = vector.load %arg3[%c0_20, %c32_21, %c0_22] : memref<1x88x256xf32, #tpu.memory_space<vmem>>, vector<1x12x32xf32>
    %21 = vector.shape_cast %20 : vector<1x12x32xf32> to vector<12x32xf32>
    %c0_23 = arith.constant 0 : index
    %c48_24 = arith.constant 48 : index
    %c0_25 = arith.constant 0 : index
    %22 = vector.load %arg3[%c0_23, %c48_24, %c0_25] : memref<1x88x256xf32, #tpu.memory_space<vmem>>, vector<1x12x4xf32>
    %23 = vector.shape_cast %22 : vector<1x12x4xf32> to vector<12x4xf32>
    %c0_26 = arith.constant 0 : index
    %c64_27 = arith.constant 64 : index
    %c0_28 = arith.constant 0 : index
    %24 = vector.load %arg3[%c0_26, %c64_27, %c0_28] : memref<1x88x256xf32, #tpu.memory_space<vmem>>, vector<1x12x3xf32>
    %25 = vector.shape_cast %24 : vector<1x12x3xf32> to vector<12x3xf32>
    %c0_29 = arith.constant 0 : index
    %c80 = arith.constant 80 : index
    %c0_30 = arith.constant 0 : index
    %26 = vector.load %arg3[%c0_29, %c80, %c0_30] : memref<1x88x256xf32, #tpu.memory_space<vmem>>, vector<1x1x154xf32>
    %27 = vector.shape_cast %26 : vector<1x1x154xf32> to vector<1x154xf32>
    %28 = arith.truncf %3 : vector<16x32xf32> to vector<16x32xbf16>
    %cst = arith.constant dense<0.000000e+00> : vector<16x154xf32>
    %29 = tpu.matmul %28, %5, %cst {dimension_numbers = #tpu.dot_dimension_numbers<[1], [0], [0], [1], [0, 0, 1, 1], [], []>} : vector<16x32xbf16>, vector<32x154xbf16>, vector<16x154xf32> -> vector<16x154xf32>
    %30 = vector.broadcast %27 : vector<1x154xf32> to vector<16x154xf32>
    %31 = arith.addf %29, %30 : vector<16x154xf32>
    %32 = arith.truncf %31 : vector<16x154xf32> to vector<16x154xbf16>
    %cst_31 = arith.constant dense<0.000000e+00> : vector<12x154xf32>
    %33 = tpu.matmul %7, %32, %cst_31 {dimension_numbers = #tpu.dot_dimension_numbers<[1], [0], [0], [1], [0, 0, 1, 1], [], []>} : vector<12x16xbf16>, vector<16x154xbf16>, vector<12x154xf32> -> vector<12x154xf32>
    %34 = arith.truncf %33 : vector<12x154xf32> to vector<12x154xbf16>
    %cst_32 = arith.constant 0.000000e+00 : f32
    %35 = vector.broadcast %cst_32 : f32 to vector<12x64xf32>
    %36 = vector.extract_strided_slice %9 {offsets = [0, 0], sizes = [12, 12], strides = [1, 1]} : vector<12x120xbf16> to vector<12x12xbf16>
    %37 = vector.extract_strided_slice %34 {offsets = [0, 0], sizes = [12, 16], strides = [1, 1]} : vector<12x154xbf16> to vector<12x16xbf16>
    %cst_33 = arith.constant dense<0.000000e+00> : vector<12x16xf32>
    %38 = tpu.matmul %36, %37, %cst_33 {dimension_numbers = #tpu.dot_dimension_numbers<[1], [0], [0], [1], [0, 0, 1, 1], [], []>} : vector<12x12xbf16>, vector<12x16xbf16>, vector<12x16xf32> -> vector<12x16xf32>
    %39 = vector.extract_strided_slice %9 {offsets = [0, 12], sizes = [12, 12], strides = [1, 1]} : vector<12x120xbf16> to vector<12x12xbf16>
    %40 = vector.extract_strided_slice %34 {offsets = [0, 16], sizes = [12, 16], strides = [1, 1]} : vector<12x154xbf16> to vector<12x16xbf16>
    %cst_34 = arith.constant dense<0.000000e+00> : vector<12x16xf32>
    %41 = tpu.matmul %39, %40, %cst_34 {dimension_numbers = #tpu.dot_dimension_numbers<[1], [0], [0], [1], [0, 0, 1, 1], [], []>} : vector<12x12xbf16>, vector<12x16xbf16>, vector<12x16xf32> -> vector<12x16xf32>
    %42 = arith.addf %38, %41 : vector<12x16xf32>
    %43 = vector.extract_strided_slice %9 {offsets = [0, 24], sizes = [12, 12], strides = [1, 1]} : vector<12x120xbf16> to vector<12x12xbf16>
    %44 = vector.extract_strided_slice %34 {offsets = [0, 32], sizes = [12, 16], strides = [1, 1]} : vector<12x154xbf16> to vector<12x16xbf16>
    %cst_35 = arith.constant dense<0.000000e+00> : vector<12x16xf32>
    %45 = tpu.matmul %43, %44, %cst_35 {dimension_numbers = #tpu.dot_dimension_numbers<[1], [0], [0], [1], [0, 0, 1, 1], [], []>} : vector<12x12xbf16>, vector<12x16xbf16>, vector<12x16xf32> -> vector<12x16xf32>
    %46 = arith.addf %42, %45 : vector<12x16xf32>
    %47 = vector.extract_strided_slice %23 {offsets = [0, 0], sizes = [12, 1], strides = [1, 1]} : vector<12x4xf32> to vector<12x1xf32>
    %48 = vector.broadcast %47 : vector<12x1xf32> to vector<12x16xf32>
    %49 = arith.addf %46, %48 : vector<12x16xf32>
    %cst_36 = arith.constant 0.000000e+00 : f32
    %50 = vector.broadcast %cst_36 : f32 to vector<12x16xf32>
    %51 = arith.maximumf %49, %50 : vector<12x16xf32>
    %52 = arith.truncf %51 : vector<12x16xf32> to vector<12x16xbf16>
    %53 = vector.extract_strided_slice %11 {offsets = [0, 0], sizes = [16, 64], strides = [1, 1]} : vector<62x64xbf16> to vector<16x64xbf16>
    %cst_37 = arith.constant dense<0.000000e+00> : vector<12x64xf32>
    %54 = tpu.matmul %52, %53, %cst_37 {dimension_numbers = #tpu.dot_dimension_numbers<[1], [0], [0], [1], [0, 0, 1, 1], [], []>} : vector<12x16xbf16>, vector<16x64xbf16>, vector<12x64xf32> -> vector<12x64xf32>
    %55 = arith.addf %35, %54 : vector<12x64xf32>
    %56 = vector.extract_strided_slice %9 {offsets = [0, 36], sizes = [12, 12], strides = [1, 1]} : vector<12x120xbf16> to vector<12x12xbf16>
    %57 = vector.extract_strided_slice %34 {offsets = [0, 48], sizes = [12, 15], strides = [1, 1]} : vector<12x154xbf16> to vector<12x15xbf16>
    %cst_38 = arith.constant dense<0.000000e+00> : vector<12x15xf32>
    %58 = tpu.matmul %56, %57, %cst_38 {dimension_numbers = #tpu.dot_dimension_numbers<[1], [0], [0], [1], [0, 0, 1, 1], [], []>} : vector<12x12xbf16>, vector<12x15xbf16>, vector<12x15xf32> -> vector<12x15xf32>
    %59 = vector.extract_strided_slice %9 {offsets = [0, 48], sizes = [12, 12], strides = [1, 1]} : vector<12x120xbf16> to vector<12x12xbf16>
    %60 = vector.extract_strided_slice %34 {offsets = [0, 63], sizes = [12, 15], strides = [1, 1]} : vector<12x154xbf16> to vector<12x15xbf16>
    %cst_39 = arith.constant dense<0.000000e+00> : vector<12x15xf32>
    %61 = tpu.matmul %59, %60, %cst_39 {dimension_numbers = #tpu.dot_dimension_numbers<[1], [0], [0], [1], [0, 0, 1, 1], [], []>} : vector<12x12xbf16>, vector<12x15xbf16>, vector<12x15xf32> -> vector<12x15xf32>
    %62 = arith.addf %58, %61 : vector<12x15xf32>
    %63 = vector.extract_strided_slice %9 {offsets = [0, 60], sizes = [12, 12], strides = [1, 1]} : vector<12x120xbf16> to vector<12x12xbf16>
    %64 = vector.extract_strided_slice %34 {offsets = [0, 78], sizes = [12, 15], strides = [1, 1]} : vector<12x154xbf16> to vector<12x15xbf16>
    %cst_40 = arith.constant dense<0.000000e+00> : vector<12x15xf32>
    %65 = tpu.matmul %63, %64, %cst_40 {dimension_numbers = #tpu.dot_dimension_numbers<[1], [0], [0], [1], [0, 0, 1, 1], [], []>} : vector<12x12xbf16>, vector<12x15xbf16>, vector<12x15xf32> -> vector<12x15xf32>
    %66 = arith.addf %62, %65 : vector<12x15xf32>
    %67 = vector.extract_strided_slice %23 {offsets = [0, 1], sizes = [12, 1], strides = [1, 1]} : vector<12x4xf32> to vector<12x1xf32>
    %68 = vector.broadcast %67 : vector<12x1xf32> to vector<12x15xf32>
    %69 = arith.addf %66, %68 : vector<12x15xf32>
    %cst_41 = arith.constant 0.000000e+00 : f32
    %70 = vector.broadcast %cst_41 : f32 to vector<12x15xf32>
    %71 = arith.maximumf %69, %70 : vector<12x15xf32>
    %72 = arith.truncf %71 : vector<12x15xf32> to vector<12x15xbf16>
    %73 = vector.extract_strided_slice %11 {offsets = [16, 0], sizes = [15, 64], strides = [1, 1]} : vector<62x64xbf16> to vector<15x64xbf16>
    %cst_42 = arith.constant dense<0.000000e+00> : vector<12x64xf32>
    %74 = tpu.matmul %72, %73, %cst_42 {dimension_numbers = #tpu.dot_dimension_numbers<[1], [0], [0], [1], [0, 0, 1, 1], [], []>} : vector<12x15xbf16>, vector<15x64xbf16>, vector<12x64xf32> -> vector<12x64xf32>
    %75 = arith.addf %55, %74 : vector<12x64xf32>
    %76 = vector.extract_strided_slice %9 {offsets = [0, 72], sizes = [12, 12], strides = [1, 1]} : vector<12x120xbf16> to vector<12x12xbf16>
    %77 = vector.extract_strided_slice %34 {offsets = [0, 93], sizes = [12, 15], strides = [1, 1]} : vector<12x154xbf16> to vector<12x15xbf16>
    %cst_43 = arith.constant dense<0.000000e+00> : vector<12x15xf32>
    %78 = tpu.matmul %76, %77, %cst_43 {dimension_numbers = #tpu.dot_dimension_numbers<[1], [0], [0], [1], [0, 0, 1, 1], [], []>} : vector<12x12xbf16>, vector<12x15xbf16>, vector<12x15xf32> -> vector<12x15xf32>
    %79 = vector.extract_strided_slice %9 {offsets = [0, 84], sizes = [12, 12], strides = [1, 1]} : vector<12x120xbf16> to vector<12x12xbf16>
    %80 = vector.extract_strided_slice %34 {offsets = [0, 108], sizes = [12, 15], strides = [1, 1]} : vector<12x154xbf16> to vector<12x15xbf16>
    %cst_44 = arith.constant dense<0.000000e+00> : vector<12x15xf32>
    %81 = tpu.matmul %79, %80, %cst_44 {dimension_numbers = #tpu.dot_dimension_numbers<[1], [0], [0], [1], [0, 0, 1, 1], [], []>} : vector<12x12xbf16>, vector<12x15xbf16>, vector<12x15xf32> -> vector<12x15xf32>
    %82 = arith.addf %78, %81 : vector<12x15xf32>
    %83 = vector.extract_strided_slice %9 {offsets = [0, 96], sizes = [12, 12], strides = [1, 1]} : vector<12x120xbf16> to vector<12x12xbf16>
    %84 = vector.extract_strided_slice %34 {offsets = [0, 123], sizes = [12, 15], strides = [1, 1]} : vector<12x154xbf16> to vector<12x15xbf16>
    %cst_45 = arith.constant dense<0.000000e+00> : vector<12x15xf32>
    %85 = tpu.matmul %83, %84, %cst_45 {dimension_numbers = #tpu.dot_dimension_numbers<[1], [0], [0], [1], [0, 0, 1, 1], [], []>} : vector<12x12xbf16>, vector<12x15xbf16>, vector<12x15xf32> -> vector<12x15xf32>
    %86 = arith.addf %82, %85 : vector<12x15xf32>
    %87 = vector.extract_strided_slice %23 {offsets = [0, 2], sizes = [12, 1], strides = [1, 1]} : vector<12x4xf32> to vector<12x1xf32>
    %88 = vector.broadcast %87 : vector<12x1xf32> to vector<12x15xf32>
    %89 = arith.addf %86, %88 : vector<12x15xf32>
    %cst_46 = arith.constant 0.000000e+00 : f32
    %90 = vector.broadcast %cst_46 : f32 to vector<12x15xf32>
    %91 = arith.maximumf %89, %90 : vector<12x15xf32>
    %92 = arith.truncf %91 : vector<12x15xf32> to vector<12x15xbf16>
    %93 = vector.extract_strided_slice %11 {offsets = [31, 0], sizes = [15, 64], strides = [1, 1]} : vector<62x64xbf16> to vector<15x64xbf16>
    %cst_47 = arith.constant dense<0.000000e+00> : vector<12x64xf32>
    %94 = tpu.matmul %92, %93, %cst_47 {dimension_numbers = #tpu.dot_dimension_numbers<[1], [0], [0], [1], [0, 0, 1, 1], [], []>} : vector<12x15xbf16>, vector<15x64xbf16>, vector<12x64xf32> -> vector<12x64xf32>
    %95 = arith.addf %75, %94 : vector<12x64xf32>
    %96 = vector.extract_strided_slice %9 {offsets = [0, 108], sizes = [12, 12], strides = [1, 1]} : vector<12x120xbf16> to vector<12x12xbf16>
    %97 = vector.extract_strided_slice %34 {offsets = [0, 138], sizes = [12, 16], strides = [1, 1]} : vector<12x154xbf16> to vector<12x16xbf16>
    %cst_48 = arith.constant dense<0.000000e+00> : vector<12x16xf32>
    %98 = tpu.matmul %96, %97, %cst_48 {dimension_numbers = #tpu.dot_dimension_numbers<[1], [0], [0], [1], [0, 0, 1, 1], [], []>} : vector<12x12xbf16>, vector<12x16xbf16>, vector<12x16xf32> -> vector<12x16xf32>
    %99 = vector.extract_strided_slice %23 {offsets = [0, 3], sizes = [12, 1], strides = [1, 1]} : vector<12x4xf32> to vector<12x1xf32>
    %100 = vector.broadcast %99 : vector<12x1xf32> to vector<12x16xf32>
    %101 = arith.addf %98, %100 : vector<12x16xf32>
    %cst_49 = arith.constant 0.000000e+00 : f32
    %102 = vector.broadcast %cst_49 : f32 to vector<12x16xf32>
    %103 = arith.maximumf %101, %102 : vector<12x16xf32>
    %104 = arith.truncf %103 : vector<12x16xf32> to vector<12x16xbf16>
    %105 = vector.extract_strided_slice %11 {offsets = [46, 0], sizes = [16, 64], strides = [1, 1]} : vector<62x64xbf16> to vector<16x64xbf16>
    %cst_50 = arith.constant dense<0.000000e+00> : vector<12x64xf32>
    %106 = tpu.matmul %104, %105, %cst_50 {dimension_numbers = #tpu.dot_dimension_numbers<[1], [0], [0], [1], [0, 0, 1, 1], [], []>} : vector<12x16xbf16>, vector<16x64xbf16>, vector<12x64xf32> -> vector<12x64xf32>
    %107 = arith.addf %95, %106 : vector<12x64xf32>
    %108 = arith.truncf %107 : vector<12x64xf32> to vector<12x64xbf16>
    %cst_51 = arith.constant dense<0.000000e+00> : vector<12x96xf32>
    %109 = tpu.matmul %108, %13, %cst_51 {dimension_numbers = #tpu.dot_dimension_numbers<[1], [0], [0], [1], [0, 0, 1, 1], [], []>} : vector<12x64xbf16>, vector<64x96xbf16>, vector<12x96xf32> -> vector<12x96xf32>
    %110 = vector.extract_strided_slice %109 {offsets = [0, 0], sizes = [12, 32], strides = [1, 1]} : vector<12x96xf32> to vector<12x32xf32>
    %111 = vector.extract_strided_slice %25 {offsets = [0, 0], sizes = [12, 1], strides = [1, 1]} : vector<12x3xf32> to vector<12x1xf32>
    %112 = vector.broadcast %111 : vector<12x1xf32> to vector<12x32xf32>
    %113 = arith.mulf %110, %112 : vector<12x32xf32>
    %114 = vector.extract_strided_slice %109 {offsets = [0, 32], sizes = [12, 32], strides = [1, 1]} : vector<12x96xf32> to vector<12x32xf32>
    %115 = vector.extract_strided_slice %25 {offsets = [0, 1], sizes = [12, 1], strides = [1, 1]} : vector<12x3xf32> to vector<12x1xf32>
    %116 = vector.broadcast %115 : vector<12x1xf32> to vector<12x32xf32>
    %117 = arith.mulf %114, %116 : vector<12x32xf32>
    %118 = arith.addf %113, %117 : vector<12x32xf32>
    %119 = vector.extract_strided_slice %109 {offsets = [0, 64], sizes = [12, 32], strides = [1, 1]} : vector<12x96xf32> to vector<12x32xf32>
    %120 = vector.extract_strided_slice %25 {offsets = [0, 2], sizes = [12, 1], strides = [1, 1]} : vector<12x3xf32> to vector<12x1xf32>
    %121 = vector.broadcast %120 : vector<12x1xf32> to vector<12x32xf32>
    %122 = arith.mulf %119, %121 : vector<12x32xf32>
    %123 = arith.addf %118, %122 : vector<12x32xf32>
    %124 = arith.addf %123, %17 : vector<12x32xf32>
    %cst_52 = arith.constant 0.000000e+00 : f32
    %125 = vector.broadcast %cst_52 : f32 to vector<12x32xf32>
    %126 = arith.maximumf %124, %125 : vector<12x32xf32>
    %cst_53 = arith.constant dense<0.000000e+00> : vector<12xf32>
    %127 = vector.multi_reduction <add>, %126, %cst_53 [1] : vector<12x32xf32> to vector<12xf32>
    %128 = vector.shape_cast %127 : vector<12xf32> to vector<12x1xf32>
    %cst_54 = arith.constant 3.200000e+01 : f32
    %129 = vector.broadcast %cst_54 : f32 to vector<12x1xf32>
    %130 = arith.divf %128, %129 : vector<12x1xf32>
    %131 = vector.broadcast %130 : vector<12x1xf32> to vector<12x32xf32>
    %132 = arith.subf %126, %131 : vector<12x32xf32>
    %133 = arith.mulf %132, %132 : vector<12x32xf32>
    %cst_55 = arith.constant dense<0.000000e+00> : vector<12xf32>
    %134 = vector.multi_reduction <add>, %133, %cst_55 [1] : vector<12x32xf32> to vector<12xf32>
    %135 = vector.shape_cast %134 : vector<12xf32> to vector<12x1xf32>
    %cst_56 = arith.constant 3.200000e+01 : f32
    %136 = vector.broadcast %cst_56 : f32 to vector<12x1xf32>
    %137 = arith.divf %135, %136 : vector<12x1xf32>
    %138 = vector.broadcast %130 : vector<12x1xf32> to vector<12x32xf32>
    %139 = arith.subf %126, %138 : vector<12x32xf32>
    %cst_57 = arith.constant 9.99999974E-6 : f32
    %140 = vector.broadcast %cst_57 : f32 to vector<12x1xf32>
    %141 = arith.addf %137, %140 : vector<12x1xf32>
    %142 = math.rsqrt %141 : vector<12x1xf32>
    %143 = vector.broadcast %142 : vector<12x1xf32> to vector<12x32xf32>
    %144 = arith.mulf %139, %143 : vector<12x32xf32>
    %145 = arith.mulf %144, %19 : vector<12x32xf32>
    %146 = arith.addf %145, %21 : vector<12x32xf32>
    %147 = arith.truncf %146 : vector<12x32xf32> to vector<12x32xbf16>
    %cst_58 = arith.constant dense<0.000000e+00> : vector<16x32xf32>
    %148 = tpu.matmul %15, %147, %cst_58 {dimension_numbers = #tpu.dot_dimension_numbers<[1], [0], [0], [1], [0, 0, 1, 1], [], []>} : vector<16x12xbf16>, vector<12x32xbf16>, vector<16x32xf32> -> vector<16x32xf32>
    %149 = arith.addf %3, %148 : vector<16x32xf32>
    %c0_59 = arith.constant 0 : index
    %c0_60 = arith.constant 0 : index
    %150 = vector.load %arg4[%c0_59, %c0_60] : memref<16x32xf32, #tpu.memory_space<vmem>>, vector<16x32xf32>
    tpu.vector_store %arg4[%c0_59, %c0_60], %149 {strides = array<i32>} : memref<16x32xf32, #tpu.memory_space<vmem>>, vector<16x32xf32>,
    return
  }
  func.func @transform_0(%arg0: i32) -> (i32, i32) {
    %c0_i32 = arith.constant 0 : i32
    %c0_i32_0 = arith.constant 0 : i32
    %c0_i32_1 = arith.constant 0 : i32
    return %c0_i32, %c0_i32_0 : i32, i32
  }
  func.func @transform_1(%arg0: i32) -> (i32, i32, i32) {
    %c0_i32 = arith.constant 0 : i32
    %c0_i32_0 = arith.constant 0 : i32
    %c0_i32_1 = arith.constant 0 : i32
    return %arg0, %c0_i32, %c0_i32_0 : i32, i32, i32
  }
  func.func @transform_2(%arg0: i32) -> (i32, i32, i32) {
    %c0_i32 = arith.constant 0 : i32
    %c0_i32_0 = arith.constant 0 : i32
    %c0_i32_1 = arith.constant 0 : i32
    return %arg0, %c0_i32, %c0_i32_0 : i32, i32, i32
  }
  func.func @transform_3(%arg0: i32) -> (i32, i32) {
    %c0_i32 = arith.constant 0 : i32
    %c0_i32_0 = arith.constant 0 : i32
    %c0_i32_1 = arith.constant 0 : i32
    return %c0_i32, %c0_i32_0 : i32, i32
  }
}

</mosaic_0001>

<llo_original>
// kernel: forward.1
$region0: #{forward.1}
  #allocation0 [shape = 'u32[]', space=smem, size = 0x4, offset = 0x4, fixed_abs, tag = 'smem constant byte address 0x4 - core index']
  #allocation1 [shape = 'u32[144,128]{1,0:T(1,128)}', space=vmem, size = 0x12000, scoped, tag = 'internal scratch']
  %s0 = inlined_call_operand.hbm [shape: f32[16,32], index: 0, kind: input, shape index: {}, may-alias: {0,3}]
  %s1 = inlined_call_operand.hbm [shape: bf16[2,208,256], index: 1, kind: input, shape index: {}]
  %s2 = inlined_call_operand.hbm [shape: f32[2,88,256], index: 2, kind: input, shape index: {}]
  %s3 = inlined_call_operand.hbm [shape: f32[16,32], index: 3, kind: output, shape index: {}, may-alias: {0,3}]
  %s4 = sld [smem:[#allocation0]]
  $region61: #{forward.1} parent=0
    _
  %s6 = ssub.s32 1, %s4
  %s7 = scalar_select 0, %s6, %s4
  $region1: #{forward.1} parent=0
    #allocation2 [shape = 'u8[8192]{0}', space=vmem, size = 0x2000, scoped, tag = 'input window, operand 0, single buffered']
    #allocation3 [shape = 's32[2]{0}', space=sflag, size = 0x8, scoped, tag = 'scoped memory for forward.1']
    #allocation4 [shape = 's32[2]{0}', space=sflag, size = 0x8, scoped, tag = 'scoped memory for forward.1']
    #allocation5 [shape = 'u8[212992]{0}', space=vmem, size = 0x34000, scoped, tag = 'input window, operand 1']
    #allocation6 [shape = 's32[2]{0}', space=sflag, size = 0x8, scoped, tag = 'scoped memory for forward.1']
    #allocation7 [shape = 'u8[180224]{0}', space=vmem, size = 0x2c000, scoped, tag = 'input window, operand 2']
    #allocation8 [shape = 'u8[8192]{0}', space=vmem, size = 0x2000, scoped, tag = 'output window, operand 0, single buffered']
    %8 = vsyncpa [#allocation3], 0
    %9 = vsyncpa [#allocation6], 0
    %s10 = scalar_lea.sflag [#allocation6], 1
    %11 = vsyncpa %s10, 0
    %12 = vsyncpa [#allocation4], 0
    loop: start=0, step=1, limit=4
    $region2: #{forward.1} parent=1 // loop_pre_header
      _
    $region3: #{forward.1} parent=1 // loop_header
      %s14 = sphi 0, %s18
      %p15 = scmp.ge.s32.totalorder %s14, 4
      %s22 = sphi 0, %s22
      %s24 = sphi 0, %s22
      %s25 = sphi 0, %s24
      %s39 = sphi 0, %s25
      %s45 = sphi 0, %s47
      %s48 = sphi 0, %s45
      %s49 = sphi 0, %s48
      %s65 = sphi 0, %s49
      %s71 = sphi 0, %s73
      %s74 = sphi 0, %s71
      %s75 = sphi 0, %s74
      %s91 = sphi 0, %s75
      %s95 = sphi 0, %s95
      %s97 = sphi 0, %s95
      %s98 = sphi 0, %s97
      %s112 = sphi 0, %s98
    $region4: #{forward.1} parent=1 // loop_header_branch
      %17 = sbr.rel (%p15) target = $region8
    $region5: #{forward.1} parent=1 // loop_body
      %s19 = ssub.s32 %s14, 1
      %s20 = ssub.s32 %s14, 2
      %s21 = sadd.s32 %s14, 1
      %s23 = sadd.s32 %s22, 1
      %p26 = scmp.eq.s32.totalorder %s14, 1
      %p27 = scmp.ne.s32.totalorder %s22, %s24
      %p28 = scmp.eq.s32.totalorder %s14, 0
      %p29 = por %p27, %p28
      %p30 = scmp.ne.s32.totalorder %s22, %s24
      %p31 = scmp.eq.s32.totalorder %s19, 1
      %p32 = por %p30, %p31
      %p33 = scmp.ne.s32.totalorder %s24, %s25
      %p34 = scmp.eq.s32.totalorder %s19, 0
      %p35 = por %p33, %p34
      %p36 = scmp.ne.s32.totalorder %s24, %s25
      %p37 = scmp.eq.s32.totalorder %s20, 1
      %p38 = por %p36, %p37
      %p40 = scmp.ne.s32.totalorder %s25, %s39
      %p41 = scmp.eq.s32.totalorder %s20, 0
      %p42 = por %p40, %p41
      %s43 = ssub.s32 %s14, %s21
      %p44 = scmp.eq.s32.totalorder %s43, 0
      %s46 = sadd.s32 %s45, 1
      %s47 = scalar_select %p44, %s45, %s46
      %p50 = pneg %p44
      %p51 = scmp.eq.s32.totalorder %s14, 1
      %p52 = por %p50, %p51
      %p53 = scmp.ne.s32.totalorder %s45, %s48
      %p54 = scmp.eq.s32.totalorder %s14, 0
      %p55 = por %p53, %p54
      %p56 = scmp.ne.s32.totalorder %s45, %s48
      %p57 = scmp.eq.s32.totalorder %s19, 1
      %p58 = por %p56, %p57
      %p59 = scmp.ne.s32.totalorder %s48, %s49
      %p60 = scmp.eq.s32.totalorder %s19, 0
      %p61 = por %p59, %p60
      %p62 = scmp.ne.s32.totalorder %s48, %s49
      %p63 = scmp.eq.s32.totalorder %s20, 1
      %p64 = por %p62, %p63
      %p66 = scmp.ne.s32.totalorder %s49, %s65
      %p67 = scmp.eq.s32.totalorder %s20, 0
      %p68 = por %p66, %p67
      %s69 = ssub.s32 %s14, %s21
      %p70 = scmp.eq.s32.totalorder %s69, 0
      %s72 = sadd.s32 %s71, 1
      %s73 = scalar_select %p70, %s71, %s72
      %p76 = pneg %p70
      %p77 = scmp.eq.s32.totalorder %s14, 1
      %p78 = por %p76, %p77
      %p79 = scmp.ne.s32.totalorder %s71, %s74
      %p80 = scmp.eq.s32.totalorder %s14, 0
      %p81 = por %p79, %p80
      %p82 = scmp.ne.s32.totalorder %s71, %s74
      %p83 = scmp.eq.s32.totalorder %s19, 1
      %p84 = por %p82, %p83
      %p85 = scmp.ne.s32.totalorder %s74, %s75
      %p86 = scmp.eq.s32.totalorder %s19, 0
      %p87 = por %p85, %p86
      %p88 = scmp.ne.s32.totalorder %s74, %s75
      %p89 = scmp.eq.s32.totalorder %s20, 1
      %p90 = por %p88, %p89
      %p92 = scmp.ne.s32.totalorder %s75, %s91
      %p93 = scmp.eq.s32.totalorder %s20, 0
      %p94 = por %p92, %p93
      %s96 = sadd.s32 %s95, 1
      %p99 = scmp.eq.s32.totalorder %s14, 1
      %p100 = scmp.ne.s32.totalorder %s95, %s97
      %p101 = scmp.eq.s32.totalorder %s14, 0
      %p102 = por %p100, %p101
      %p103 = scmp.ne.s32.totalorder %s95, %s97
      %p104 = scmp.eq.s32.totalorder %s19, 1
      %p105 = por %p103, %p104
      %p106 = scmp.ne.s32.totalorder %s97, %s98
      %p107 = scmp.eq.s32.totalorder %s19, 0
      %p108 = por %p106, %p107
      %p109 = scmp.ne.s32.totalorder %s97, %s98
      %p110 = scmp.eq.s32.totalorder %s20, 1
      %p111 = por %p109, %p110
      %p113 = scmp.ne.s32.totalorder %s98, %s112
      %p114 = scmp.eq.s32.totalorder %s20, 0
      %p115 = por %p113, %p114
      %p116 = scmp.le.s32.totalorder 1, %s14
      %p117 = scmp.lt.s32.totalorder %s14, 3
      %p118 = pnand %p116, %p117
      %p119 = pneg %p118
      // Predicated region
      $region9: #{forward.1} parent=5 // pred_check
        _
      $region10: #{forward.1} parent=5 // pred_check_branch
        %121 = sbr.rel (%p118) target = $region12
      $region11: #{forward.1} parent=5 // pred_region
        %s122 = ssub.s32 %s14, 1
        // Predicated region
        $region13: #{forward.1} parent=11 // pred_check
          %p123 = pneg %p35
        $region14: #{forward.1} parent=11 // pred_check_branch
          %125 = sbr.rel (%p123) target = $region16
        $region15: #{forward.1} parent=11 // pred_region
          %s127 = ssub.s32 256, 256
          %128 = vsyncadd [#allocation3], %s127
          %s129 = sshll.u32 [#allocation2], 4
          %s130 = int_to_ptr.vmem [resolvable:$true] %s129
          %135 = dma.hbm_to_vmem [thread:$0]  %s0, 256, %s130, [#allocation3], 128, 128, 8
        $region16: #{forward.1} parent=11 // pred_fallthru
          _
      $region12: #{forward.1} parent=5 // pred_fallthru
        _
      %p136 = scmp.lt.s32.totalorder %s14, 2
      // Predicated region
      $region17: #{forward.1} parent=5 // pred_check
        %p137 = pneg %p136
      $region18: #{forward.1} parent=5 // pred_check_branch
        %139 = sbr.rel (%p137) target = $region20
      $region19: #{forward.1} parent=5 // pred_region
        // Predicated region
        $region21: #{forward.1} parent=19 // pred_check
          %p140 = pneg %p55
        $region22: #{forward.1} parent=19 // pred_check_branch
          %142 = sbr.rel (%p140) target = $region24
        $region23: #{forward.1} parent=19 // pred_region
          %s143 = sand.u32 %s14, 1
          %s144 = scalar_lea.sflag [#allocation6], %s143
          %s145 = sand.u32 %s45, 1
          %s146 = smul.addr %s145, 208
          %s147 = scalar_lea.vmem [#allocation5], %s146
          %s149 = ssub.s32 3328, 3328
          %150 = vsyncadd %s144, %s149
          %s151 = smul.addr %s14, 52
          %s152 = smul.addr %s151, 64
          %s153 = scalar_lea.hbm %s1, %s152
          %s154 = sshll.u32 %s147, 4
          %s155 = int_to_ptr.vmem [resolvable:$true] %s154
          %160 = dma.hbm_to_vmem [thread:$0]  %s153, 3328, %s155, %s144, 128, 128, 8
        $region24: #{forward.1} parent=19 // pred_fallthru
          _
        // Predicated region
        $region25: #{forward.1} parent=19 // pred_check
          %p161 = pneg %p81
        $region26: #{forward.1} parent=19 // pred_check_branch
          %163 = sbr.rel (%p161) target = $region28
        $region27: #{forward.1} parent=19 // pred_region
          %s164 = sand.u32 %s14, 1
          %s165 = scalar_lea.sflag [#allocation6], %s164
          %s166 = sand.u32 %s71, 1
          %s167 = smul.addr %s166, 176
          %s168 = scalar_lea.vmem [#allocation7], %s167
          %s170 = ssub.s32 2816, 2816
          %171 = vsyncadd %s165, %s170
          %s172 = smul.addr %s14, 22
          %s173 = smul.addr %s172, 128
          %s174 = scalar_lea.hbm %s2, %s173
          %s175 = sshll.u32 %s168, 4
          %s176 = int_to_ptr.vmem [resolvable:$true] %s175
          %181 = dma.hbm_to_vmem [thread:$0]  %s174, 2816, %s176, %s165, 256, 256, 16
        $region28: #{forward.1} parent=19 // pred_fallthru
          _
      $region20: #{forward.1} parent=5 // pred_fallthru
        _
      %p182 = scmp.le.s32.totalorder 1, %s14
      %p183 = scmp.lt.s32.totalorder %s14, 3
      %p184 = pnand %p182, %p183
      %p185 = pneg %p184
      // Predicated region
      $region29: #{forward.1} parent=5 // pred_check
        _
      $region30: #{forward.1} parent=5 // pred_check_branch
        %187 = sbr.rel (%p184) target = $region32
      $region31: #{forward.1} parent=5 // pred_region
        %s188 = ssub.s32 %s14, 1
        // Predicated region
        $region33: #{forward.1} parent=31 // pred_check
          %p189 = pneg %p35
        $region34: #{forward.1} parent=31 // pred_check_branch
          %191 = sbr.rel (%p189) target = $region36
        $region35: #{forward.1} parent=31 // pred_region
          %192 = dma.done [#allocation3], 256
        $region36: #{forward.1} parent=31 // pred_fallthru
          _
        %s193 = sand.u32 %s19, 1
        %s194 = scalar_lea.sflag [#allocation6], %s193
        %s195 = sand.u32 %s48, 1
        %s196 = smul.addr %s195, 208
        %s197 = scalar_lea.vmem [#allocation5], %s196
        // Predicated region
        $region37: #{forward.1} parent=31 // pred_check
          %p198 = pneg %p61
        $region38: #{forward.1} parent=31 // pred_check_branch
          %200 = sbr.rel (%p198) target = $region40
        $region39: #{forward.1} parent=31 // pred_region
          %201 = dma.done %s194, 3328
        $region40: #{forward.1} parent=31 // pred_fallthru
          _
        %s202 = sand.u32 %s19, 1
        %s203 = scalar_lea.sflag [#allocation6], %s202
        %s204 = sand.u32 %s74, 1
        %s205 = smul.addr %s204, 176
        %s206 = scalar_lea.vmem [#allocation7], %s205
        // Predicated region
        $region41: #{forward.1} parent=31 // pred_check
          %p207 = pneg %p87
        $region42: #{forward.1} parent=31 // pred_check_branch
          %209 = sbr.rel (%p207) target = $region44
        $region43: #{forward.1} parent=31 // pred_region
          %210 = dma.done %s203, 2816
        $region44: #{forward.1} parent=31 // pred_fallthru
          _
        %p211 = pneg %p35
        %p212 = pneg %p32
        %s213 = sand.u32 %s19, 1
        %s214 = scalar_lea.sflag [#allocation6], %s213
        %s215 = sand.u32 %s48, 1
        %s216 = smul.addr %s215, 208
        %s217 = scalar_lea.vmem [#allocation5], %s216
        %p218 = pneg %p61
        %p219 = pneg %p58
        %s220 = sand.u32 %s19, 1
        %s221 = scalar_lea.sflag [#allocation6], %s220
        %s222 = sand.u32 %s74, 1
        %s223 = smul.addr %s222, 176
        %s224 = scalar_lea.vmem [#allocation7], %s223
        %p225 = pneg %p87
        %p226 = pneg %p84
        %p227 = pneg %p108
        %p228 = pneg %p105
        %p230 = scmp.eq.s32.totalorder %s19, 0
        // Predicated region
        $region45: #{forward.1} parent=31 // pred_check
          %p231 = pneg %p230
        $region46: #{forward.1} parent=31 // pred_check_branch
          %233 = sbr.rel (%p231) target = $region48
        $region47: #{forward.1} parent=31 // pred_region
          %v234 = vld [vmem:[#allocation2] sm:$0xff]
          %v235 = vld [vmem:[#allocation2 + $0x8] sm:$0xff]
          %vm236 = vcmask 261120
          %237 = vst.msk [vmem:[#allocation8] sm:$0xff] %vm236, %v234
          %238 = vst.msk [vmem:[#allocation8 + $0x8] sm:$0xff] %vm236, %v235
        $region48: #{forward.1} parent=31 // pred_fallthru
          _
        %v239 = vld [vmem:[#allocation8] sm:$0xff]
        %v240 = vld [vmem:[#allocation8 + $0x8] sm:$0xff]
        %v241 = vld [vmem:[%s197] sm:$0xff]
        %v242 = vld [vmem:[%s197 + $0x8] sm:$0xff]
        %v243 = vld [vmem:[%s197 + $0x10] sm:$0xff]
        %v244 = vld [vmem:[%s197 + $0x18] sm:$0xff]
        %v245 = vld [vmem:[%s197 + $0x20] sm:$0xf]
        %v246 = vld [vmem:[%s197 + $0x28] sm:$0x3]
        %v247 = vld [vmem:[%s197 + $0x30] sm:$0xf]
        %v248 = vld [vmem:[%s197 + $0x38] sm:$0x3]
        %v249 = vld [vmem:[%s197 + $0x40] sm:$0xf]
        %v250 = vld [vmem:[%s197 + $0x48] sm:$0xf]
        %v251 = vld [vmem:[%s197 + $0x50] sm:$0xf]
        %v252 = vld [vmem:[%s197 + $0x58] sm:$0xf]
        %v253 = vld [vmem:[%s197 + $0x60] sm:$0xf]
        %v254 = vld [vmem:[%s197 + $0x68] sm:$0xf]
        %v255 = vld [vmem:[%s197 + $0x70] sm:$0xf]
        %v256 = vld [vmem:[%s197 + $0x78] sm:$0x7]
        %v257 = vld [vmem:[%s197 + $0x80] sm:$0xf]
        %v258 = vld [vmem:[%s197 + $0x88] sm:$0xf]
        %v259 = vld [vmem:[%s197 + $0x90] sm:$0xf]
        %v260 = vld [vmem:[%s197 + $0x98] sm:$0xf]
        %v261 = vld [vmem:[%s197 + $0xa0] sm:$0xf]
        %v262 = vld [vmem:[%s197 + $0xa8] sm:$0xf]
        %v263 = vld [vmem:[%s197 + $0xb0] sm:$0xf]
        %v264 = vld [vmem:[%s197 + $0xb8] sm:$0xf]
        %v265 = vld [vmem:[%s197 + $0xc0] sm:$0xf]
        %v266 = vld [vmem:[%s197 + $0xc8] sm:$0xf]
        %v267 = vld [vmem:[%s206] sm:$0xff]
        %v268 = vld [vmem:[%s206 + $0x10] sm:$0xf]
        %v269 = vld [vmem:[%s206 + $0x20] sm:$0xff]
        %v270 = vld [vmem:[%s206 + $0x30] sm:$0xf]
        %v271 = vld [vmem:[%s206 + $0x40] sm:$0xff]
        %v272 = vld [vmem:[%s206 + $0x50] sm:$0xf]
        %v273 = vld [vmem:[%s206 + $0x60] sm:$0xff]
        %v274 = vld [vmem:[%s206 + $0x70] sm:$0xf]
        %v275 = vld [vmem:[%s206 + $0x80] sm:$0xff]
        %v276 = vld [vmem:[%s206 + $0x90] sm:$0xf]
        %s277 = scalar_lea.vmem %s206, 160 [#allocation7]
        %v278 = vld [vmem:[%s277] ss:$8 sm:$0x3]
        %v279 = vpack.c.bf16 %v240, %v239
        %v281 = vlaneseq
        %v282 = vshrl.u32 %v281, 7
        %v283 = vsub.s32 0, %v282
        %v284 = vrot.slane %v278, %v283
        %v285 = vlaneseq
        %v286 = vshrl.u32 %v285, 7
        %v287 = vsub.s32 1, %v286
        %v288 = vrot.slane %v278, %v287
        %v295 = vunpack.c.l.b16 %v241
        %v296 = vunpack.c.h.b16 %v241
        %v297 = vunpack.c.l.b16 %v242
        %v298 = vunpack.c.h.b16 %v242
        %v299 = vunpack.c.l.b16 %v243
        %v300 = vunpack.c.h.b16 %v243
        %v301 = vunpack.c.l.b16 %v244
        %v302 = vunpack.c.h.b16 %v244
        %v303 = vpack.c.b16 %v297, %v295
        %v304 = vpack.c.b16 %v298, %v296
        %v305 = vpack.c.b16 %v301, %v299
        %v306 = vpack.c.b16 %v302, %v300
        %vm311 = vcmask 261120
        %v313 = vsel %vm311, %v279, 0
        %315 = vmatprep.subr.bf16.mxu0 %v304
        %316 = vmatpush1.bf16.msra.mxu0 %v303
        %317 = vmatprep.subr.bf16.mxu0 %v306
        %318 = vmatpush1.bf16.msra.mxu0 %v305
        %319 = vmatprep.subr.bf16.mxu0 0
        %320 = vmatpush1.bf16.msra.mxu0 0
        %321 = vmatprep.subr.bf16.mxu0 0
        %322 = vmatpush1.bf16.msra.mxu0 0
        %323 = vmatprep.subr.bf16.mxu0 0
        %324 = vmatpush1.bf16.msra.mxu0 0
        %325 = vmatprep.subr.bf16.mxu0 0
        %326 = vmatpush1.bf16.msra.mxu0 0
        %327 = vmatprep.subr.bf16.mxu0 0
        %328 = vmatpush1.bf16.msra.mxu0 0
        %329 = vmatprep.subr.bf16.mxu0 0
        %330 = vmatpush1.bf16.msra.mxu0 0
        %331 = vmatprep.subr.bf16.mxu0 0
        %332 = vmatpush1.bf16.msra.mxu0 0
        %333 = vmatprep.subr.bf16.mxu0 0
        %334 = vmatpush1.bf16.msra.mxu0 0
        %335 = vmatprep.subr.bf16.mxu0 0
        %336 = vmatpush1.bf16.msra.mxu0 0
        %337 = vmatprep.subr.bf16.mxu0 0
        %338 = vmatpush1.bf16.msra.mxu0 0
        %339 = vmatprep.subr.bf16.mxu0 0
        %340 = vmatpush1.bf16.msra.mxu0 0
        %341 = vmatprep.subr.bf16.mxu0 0
        %342 = vmatpush1.bf16.msra.mxu0 0
        %343 = vmatprep.subr.bf16.mxu0 0
        %344 = vmatpush1.bf16.msra.mxu0 0
        %345 = vmatprep.subr.bf16.mxu0 0
        %346 = vmatpush1.bf16.msra.mxu0 0
        %347 = vmatprep.mubr.bf16.mxu0 0
        %348 = vmatmul.mubr.bf16.gmra.mrb[0].mxu0 %v313
        %v349 = vpop.f32.mrb[0].mxu0
        %v350 = vadd.f32 %v284, %v349
        %v351 = vpop.f32.mrb[0].mxu0
        %v352 = vadd.f32 %v288, %v351
        %v353 = vpop.f32.mrb[0].mxu0
        %v354 = vadd.f32 %v284, %v353
        %v355 = vpop.f32.mrb[0].mxu0
        %v356 = vadd.f32 %v288, %v355
        %357 = vdwg.mxu0
        %v358 = vpack.c.bf16 %v354, %v350
        %v359 = vpack.c.bf16 %v356, %v352
        %v362 = vunpack.c.l.b16 %v245
        %v363 = vunpack.c.l.b16 %v246
        %v364 = vpack.c.b16 %v363, %v362
        %vm365 = vcmask 130048
        %v367 = vsel %vm365, %v364, 0
        %369 = vmatprep.subr.bf16.mxu0 %v359
        %370 = vmatpush1.bf16.msra.mxu0 %v358
        %371 = vmatprep.subr.bf16.mxu0 0
        %372 = vmatpush1.bf16.msra.mxu0 0
        %373 = vmatprep.subr.bf16.mxu0 0
        %374 = vmatpush1.bf16.msra.mxu0 0
        %375 = vmatprep.subr.bf16.mxu0 0
        %376 = vmatpush1.bf16.msra.mxu0 0
        %377 = vmatprep.subr.bf16.mxu0 0
        %378 = vmatpush1.bf16.msra.mxu0 0
        %379 = vmatprep.subr.bf16.mxu0 0
        %380 = vmatpush1.bf16.msra.mxu0 0
        %381 = vmatprep.subr.bf16.mxu0 0
        %382 = vmatpush1.bf16.msra.mxu0 0
        %383 = vmatprep.subr.bf16.mxu0 0
        %384 = vmatpush1.bf16.msra.mxu0 0
        %385 = vmatprep.subr.bf16.mxu0 0
        %386 = vmatpush1.bf16.msra.mxu0 0
        %387 = vmatprep.subr.bf16.mxu0 0
        %388 = vmatpush1.bf16.msra.mxu0 0
        %389 = vmatprep.subr.bf16.mxu0 0
        %390 = vmatpush1.bf16.msra.mxu0 0
        %391 = vmatprep.subr.bf16.mxu0 0
        %392 = vmatpush1.bf16.msra.mxu0 0
        %393 = vmatprep.subr.bf16.mxu0 0
        %394 = vmatpush1.bf16.msra.mxu0 0
        %395 = vmatprep.subr.bf16.mxu0 0
        %396 = vmatpush1.bf16.msra.mxu0 0
        %397 = vmatprep.subr.bf16.mxu0 0
        %398 = vmatpush1.bf16.msra.mxu0 0
        %399 = vmatprep.subr.bf16.mxu0 0
        %400 = vmatpush1.bf16.msra.mxu0 0
        %401 = vmatprep.mubr.bf16.mxu0 0
        %402 = vmatmul.mubr.bf16.gmra.mrb[0].mxu0 %v367
        %v403 = vpop.f32.mrb[0].mxu0
        %v404 = vadd.f32 0.0, %v403
        %v405 = vpop.f32.mrb[0].mxu0
        %v406 = vadd.f32 0.0, %v405
        %v407 = vpop.f32.mrb[0].mxu0
        %v408 = vadd.f32 0.0, %v407
        %v409 = vpop.f32.mrb[0].mxu0
        %v410 = vadd.f32 0.0, %v409
        %411 = vdwg.mxu0
        %v412 = vpack.c.bf16 %v408, %v404
        %v413 = vpack.c.bf16 %v410, %v406
        %v416 = vunpack.c.l.b16 %v247
        %v417 = vunpack.c.l.b16 %v248
        %v418 = vpack.c.b16 %v417, %v416
        %419 = vrot.lane.b32.xlu0 %v418, 116
        %v420 = vpop.permute.xlu0 %419
        %422 = vrot.lane.b32.xlu0 %v412, 112
        %v423 = vpop.permute.xlu0 %422
        %vm424 = vcmask 97280
        %v426 = vsel %vm424, %v420, 0
        %vm428 = vcmask 1045504
        %v430 = vsel %vm428, %v423, 0
        %432 = vmatprep.subr.bf16.mxu0 0
        %433 = vmatpush1.bf16.msra.mxu0 %v430
        %434 = vmatprep.subr.bf16.mxu0 0
        %435 = vmatpush1.bf16.msra.mxu0 0
        %436 = vmatprep.subr.bf16.mxu0 0
        %437 = vmatpush1.bf16.msra.mxu0 0
        %438 = vmatprep.subr.bf16.mxu0 0
        %439 = vmatpush1.bf16.msra.mxu0 0
        %440 = vmatprep.subr.bf16.mxu0 0
        %441 = vmatpush1.bf16.msra.mxu0 0
        %442 = vmatprep.subr.bf16.mxu0 0
        %443 = vmatpush1.bf16.msra.mxu0 0
        %444 = vmatprep.subr.bf16.mxu0 0
        %445 = vmatpush1.bf16.msra.mxu0 0
        %446 = vmatprep.subr.bf16.mxu0 0
        %447 = vmatpush1.bf16.msra.mxu0 0
        %448 = vmatprep.subr.bf16.mxu0 0
        %449 = vmatpush1.bf16.msra.mxu0 0
        %450 = vmatprep.subr.bf16.mxu0 0
        %451 = vmatpush1.bf16.msra.mxu0 0
        %452 = vmatprep.subr.bf16.mxu0 0
        %453 = vmatpush1.bf16.msra.mxu0 0
        %454 = vmatprep.subr.bf16.mxu0 0
        %455 = vmatpush1.bf16.msra.mxu0 0
        %456 = vmatprep.subr.bf16.mxu0 0
        %457 = vmatpush1.bf16.msra.mxu0 0
        %458 = vmatprep.subr.bf16.mxu0 0
        %459 = vmatpush1.bf16.msra.mxu0 0
        %460 = vmatprep.subr.bf16.mxu0 0
        %461 = vmatpush1.bf16.msra.mxu0 0
        %462 = vmatprep.subr.bf16.mxu0 0
        %463 = vmatpush1.bf16.msra.mxu0 0
        %464 = vmatprep.mubr.bf16.mxu0 0
        %465 = vmatmul.mubr.bf16.gmra.mrb[0].mxu0 %v426
        %v466 = vpop.f32.mrb[0].mxu0
        %v467 = vadd.f32 0.0, %v466
        %v468 = vpop.f32.mrb[0].mxu0
        %v469 = vpop.f32.mrb[0].mxu0
        %v470 = vadd.f32 0.0, %v469
        %v471 = vpop.f32.mrb[0].mxu0
        %472 = vdwg.mxu0
        %v474 = vsel %vm424, %v418, 0
        %v477 = vsel %vm428, %v412, 0
        %479 = vmatprep.subr.bf16.mxu0 0
        %480 = vmatpush1.bf16.msra.mxu0 %v477
        %481 = vmatprep.subr.bf16.mxu0 0
        %482 = vmatpush1.bf16.msra.mxu0 0
        %483 = vmatprep.subr.bf16.mxu0 0
        %484 = vmatpush1.bf16.msra.mxu0 0
        %485 = vmatprep.subr.bf16.mxu0 0
        %486 = vmatpush1.bf16.msra.mxu0 0
        %487 = vmatprep.subr.bf16.mxu0 0
        %488 = vmatpush1.bf16.msra.mxu0 0
        %489 = vmatprep.subr.bf16.mxu0 0
        %490 = vmatpush1.bf16.msra.mxu0 0
        %491 = vmatprep.subr.bf16.mxu0 0
        %492 = vmatpush1.bf16.msra.mxu0 0
        %493 = vmatprep.subr.bf16.mxu0 0
        %494 = vmatpush1.bf16.msra.mxu0 0
        %495 = vmatprep.subr.bf16.mxu0 0
        %496 = vmatpush1.bf16.msra.mxu0 0
        %497 = vmatprep.subr.bf16.mxu0 0
        %498 = vmatpush1.bf16.msra.mxu0 0
        %499 = vmatprep.subr.bf16.mxu0 0
        %500 = vmatpush1.bf16.msra.mxu0 0
        %501 = vmatprep.subr.bf16.mxu0 0
        %502 = vmatpush1.bf16.msra.mxu0 0
        %503 = vmatprep.subr.bf16.mxu0 0
        %504 = vmatpush1.bf16.msra.mxu0 0
        %505 = vmatprep.subr.bf16.mxu0 0
        %506 = vmatpush1.bf16.msra.mxu0 0
        %507 = vmatprep.subr.bf16.mxu0 0
        %508 = vmatpush1.bf16.msra.mxu0 0
        %509 = vmatprep.subr.bf16.mxu0 0
        %510 = vmatpush1.bf16.msra.mxu0 0
        %511 = vmatprep.mubr.bf16.mxu0 0
        %512 = vmatmul.mubr.bf16.gmra.mrb[0].mxu0 %v474
        %v513 = vpop.f32.mrb[0].mxu0
        %v514 = vadd.f32 %v467, %v513
        %v515 = vpop.f32.mrb[0].mxu0
        %v516 = vpop.f32.mrb[0].mxu0
        %v517 = vadd.f32 %v470, %v516
        %v518 = vpop.f32.mrb[0].mxu0
        %519 = vdwg.mxu0
        %520 = vrot.lane.b32.xlu0 %v418, 104
        %v521 = vpop.permute.xlu0 %520
        %522 = vrot.lane.b32.xlu0 %v412, 96
        %v523 = vpop.permute.xlu0 %522
        %v525 = vsel %vm424, %v521, 0
        %v528 = vsel %vm428, %v523, 0
        %530 = vmatprep.subr.bf16.mxu0 0
        %531 = vmatpush1.bf16.msra.mxu0 %v528
        %532 = vmatprep.subr.bf16.mxu0 0
        %533 = vmatpush1.bf16.msra.mxu0 0
        %534 = vmatprep.subr.bf16.mxu0 0
        %535 = vmatpush1.bf16.msra.mxu0 0
        %536 = vmatprep.subr.bf16.mxu0 0
        %537 = vmatpush1.bf16.msra.mxu0 0
        %538 = vmatprep.subr.bf16.mxu0 0
        %539 = vmatpush1.bf16.msra.mxu0 0
        %540 = vmatprep.subr.bf16.mxu0 0
        %541 = vmatpush1.bf16.msra.mxu0 0
        %542 = vmatprep.subr.bf16.mxu0 0
        %543 = vmatpush1.bf16.msra.mxu0 0
        %544 = vmatprep.subr.bf16.mxu0 0
        %545 = vmatpush1.bf16.msra.mxu0 0
        %546 = vmatprep.subr.bf16.mxu0 0
        %547 = vmatpush1.bf16.msra.mxu0 0
        %548 = vmatprep.subr.bf16.mxu0 0
        %549 = vmatpush1.bf16.msra.mxu0 0
        %550 = vmatprep.subr.bf16.mxu0 0
        %551 = vmatpush1.bf16.msra.mxu0 0
        %552 = vmatprep.subr.bf16.mxu0 0
        %553 = vmatpush1.bf16.msra.mxu0 0
        %554 = vmatprep.subr.bf16.mxu0 0
        %555 = vmatpush1.bf16.msra.mxu0 0
        %556 = vmatprep.subr.bf16.mxu0 0
        %557 = vmatpush1.bf16.msra.mxu0 0
        %558 = vmatprep.subr.bf16.mxu0 0
        %559 = vmatpush1.bf16.msra.mxu0 0
        %560 = vmatprep.subr.bf16.mxu0 0
        %561 = vmatpush1.bf16.msra.mxu0 0
        %562 = vmatprep.mubr.bf16.mxu0 0
        %563 = vmatmul.mubr.bf16.gmra.mrb[0].mxu0 %v525
        %v564 = vpop.f32.mrb[0].mxu0
        %v565 = vadd.f32 0.0, %v564
        %v566 = vpop.f32.mrb[0].mxu0
        %v567 = vpop.f32.mrb[0].mxu0
        %v568 = vadd.f32 0.0, %v567
        %v569 = vpop.f32.mrb[0].mxu0
        %570 = vdwg.mxu0
        %v571 = vadd.f32 %v514, %v565
        %v572 = vadd.f32 %v517, %v568
        %574 = vset.pattern.permute.xlu0 0
        %575 = vperm.xlu0 %574, %v273
        %v576 = vpop.permute.xlu0 %575
        %579 = vset.pattern.permute.xlu0 0
        %580 = vperm.xlu0 %579, %v274
        %v581 = vpop.permute.xlu0 %580
        %v583 = vadd.f32 %v571, %v576
        %v584 = vadd.f32 %v572, %v581
        %v585 = vmax.f32 %v583, 0.0
        %v586 = vmax.f32 %v584, 0.0
        %v587 = vpack.c.bf16 %v586, %v585
        %588 = vrot.lane.b32.xlu0 %v418, 80
        %v589 = vpop.permute.xlu0 %588
        %590 = vrot.lane.b32.xlu0 %v412, 65
        %v591 = vpop.permute.xlu0 %590
        %v593 = vsel %vm424, %v589, 0
        %v596 = vsel %vm428, %v591, 0
        %598 = vmatprep.subr.bf16.mxu0 0
        %599 = vmatpush1.bf16.msra.mxu0 %v596
        %600 = vmatprep.subr.bf16.mxu0 0
        %601 = vmatpush1.bf16.msra.mxu0 0
        %602 = vmatprep.subr.bf16.mxu0 0
        %603 = vmatpush1.bf16.msra.mxu0 0
        %604 = vmatprep.subr.bf16.mxu0 0
        %605 = vmatpush1.bf16.msra.mxu0 0
        %606 = vmatprep.subr.bf16.mxu0 0
        %607 = vmatpush1.bf16.msra.mxu0 0
        %608 = vmatprep.subr.bf16.mxu0 0
        %609 = vmatpush1.bf16.msra.mxu0 0
        %610 = vmatprep.subr.bf16.mxu0 0
        %611 = vmatpush1.bf16.msra.mxu0 0
        %612 = vmatprep.subr.bf16.mxu0 0
        %613 = vmatpush1.bf16.msra.mxu0 0
        %614 = vmatprep.subr.bf16.mxu0 0
        %615 = vmatpush1.bf16.msra.mxu0 0
        %616 = vmatprep.subr.bf16.mxu0 0
        %617 = vmatpush1.bf16.msra.mxu0 0
        %618 = vmatprep.subr.bf16.mxu0 0
        %619 = vmatpush1.bf16.msra.mxu0 0
        %620 = vmatprep.subr.bf16.mxu0 0
        %621 = vmatpush1.bf16.msra.mxu0 0
        %622 = vmatprep.subr.bf16.mxu0 0
        %623 = vmatpush1.bf16.msra.mxu0 0
        %624 = vmatprep.subr.bf16.mxu0 0
        %625 = vmatpush1.bf16.msra.mxu0 0
        %626 = vmatprep.subr.bf16.mxu0 0
        %627 = vmatpush1.bf16.msra.mxu0 0
        %628 = vmatprep.subr.bf16.mxu0 0
        %629 = vmatpush1.bf16.msra.mxu0 0
        %630 = vmatprep.mubr.bf16.mxu0 0
        %631 = vmatmul.mubr.bf16.gmra.mrb[0].mxu0 %v593
        %v632 = vpop.f32.mrb[0].mxu0
        %v633 = vadd.f32 0.0, %v632
        %v634 = vpop.f32.mrb[0].mxu0
        %v635 = vpop.f32.mrb[0].mxu0
        %v636 = vadd.f32 0.0, %v635
        %v637 = vpop.f32.mrb[0].mxu0
        %638 = vdwg.mxu0
        %639 = vrot.lane.b32.xlu0 %v418, 92
        %v640 = vpop.permute.xlu0 %639
        %641 = vrot.lane.b32.xlu0 %v412, 80
        %v642 = vpop.permute.xlu0 %641
        %v644 = vsel %vm424, %v640, 0
        %v647 = vsel %vm428, %v642, 0
        %649 = vmatprep.subr.bf16.mxu0 0
        %650 = vmatpush1.bf16.msra.mxu0 %v647
        %651 = vmatprep.subr.bf16.mxu0 0
        %652 = vmatpush1.bf16.msra.mxu0 0
        %653 = vmatprep.subr.bf16.mxu0 0
        %654 = vmatpush1.bf16.msra.mxu0 0
        %655 = vmatprep.subr.bf16.mxu0 0
        %656 = vmatpush1.bf16.msra.mxu0 0
        %657 = vmatprep.subr.bf16.mxu0 0
        %658 = vmatpush1.bf16.msra.mxu0 0
        %659 = vmatprep.subr.bf16.mxu0 0
        %660 = vmatpush1.bf16.msra.mxu0 0
        %661 = vmatprep.subr.bf16.mxu0 0
        %662 = vmatpush1.bf16.msra.mxu0 0
        %663 = vmatprep.subr.bf16.mxu0 0
        %664 = vmatpush1.bf16.msra.mxu0 0
        %665 = vmatprep.subr.bf16.mxu0 0
        %666 = vmatpush1.bf16.msra.mxu0 0
        %667 = vmatprep.subr.bf16.mxu0 0
        %668 = vmatpush1.bf16.msra.mxu0 0
        %669 = vmatprep.subr.bf16.mxu0 0
        %670 = vmatpush1.bf16.msra.mxu0 0
        %671 = vmatprep.subr.bf16.mxu0 0
        %672 = vmatpush1.bf16.msra.mxu0 0
        %673 = vmatprep.subr.bf16.mxu0 0
        %674 = vmatpush1.bf16.msra.mxu0 0
        %675 = vmatprep.subr.bf16.mxu0 0
        %676 = vmatpush1.bf16.msra.mxu0 0
        %677 = vmatprep.subr.bf16.mxu0 0
        %678 = vmatpush1.bf16.msra.mxu0 0
        %679 = vmatprep.subr.bf16.mxu0 0
        %680 = vmatpush1.bf16.msra.mxu0 0
        %681 = vmatprep.mubr.bf16.mxu0 0
        %682 = vmatmul.mubr.bf16.gmra.mrb[0].mxu0 %v644
        %v683 = vpop.f32.mrb[0].mxu0
        %v684 = vadd.f32 %v633, %v683
        %v685 = vpop.f32.mrb[0].mxu0
        %v686 = vpop.f32.mrb[0].mxu0
        %v687 = vadd.f32 %v636, %v686
        %v688 = vpop.f32.mrb[0].mxu0
        %689 = vdwg.mxu0
        %690 = vrot.lane.b32.xlu0 %v418, 68
        %v691 = vpop.permute.xlu0 %690
        %692 = vrot.lane.b32.xlu0 %v412, 50
        %v693 = vpop.permute.xlu0 %692
        %v695 = vsel %vm424, %v691, 0
        %v698 = vsel %vm428, %v693, 0
        %700 = vmatprep.subr.bf16.mxu0 0
        %701 = vmatpush1.bf16.msra.mxu0 %v698
        %702 = vmatprep.subr.bf16.mxu0 0
        %703 = vmatpush1.bf16.msra.mxu0 0
        %704 = vmatprep.subr.bf16.mxu0 0
        %705 = vmatpush1.bf16.msra.mxu0 0
        %706 = vmatprep.subr.bf16.mxu0 0
        %707 = vmatpush1.bf16.msra.mxu0 0
        %708 = vmatprep.subr.bf16.mxu0 0
        %709 = vmatpush1.bf16.msra.mxu0 0
        %710 = vmatprep.subr.bf16.mxu0 0
        %711 = vmatpush1.bf16.msra.mxu0 0
        %712 = vmatprep.subr.bf16.mxu0 0
        %713 = vmatpush1.bf16.msra.mxu0 0
        %714 = vmatprep.subr.bf16.mxu0 0
        %715 = vmatpush1.bf16.msra.mxu0 0
        %716 = vmatprep.subr.bf16.mxu0 0
        %717 = vmatpush1.bf16.msra.mxu0 0
        %718 = vmatprep.subr.bf16.mxu0 0
        %719 = vmatpush1.bf16.msra.mxu0 0
        %720 = vmatprep.subr.bf16.mxu0 0
        %721 = vmatpush1.bf16.msra.mxu0 0
        %722 = vmatprep.subr.bf16.mxu0 0
        %723 = vmatpush1.bf16.msra.mxu0 0
        %724 = vmatprep.subr.bf16.mxu0 0
        %725 = vmatpush1.bf16.msra.mxu0 0
        %726 = vmatprep.subr.bf16.mxu0 0
        %727 = vmatpush1.bf16.msra.mxu0 0
        %728 = vmatprep.subr.bf16.mxu0 0
        %729 = vmatpush1.bf16.msra.mxu0 0
        %730 = vmatprep.subr.bf16.mxu0 0
        %731 = vmatpush1.bf16.msra.mxu0 0
        %732 = vmatprep.mubr.bf16.mxu0 0
        %733 = vmatmul.mubr.bf16.gmra.mrb[0].mxu0 %v695
        %v734 = vpop.f32.mrb[0].mxu0
        %v735 = vadd.f32 0.0, %v734
        %v736 = vpop.f32.mrb[0].mxu0
        %v737 = vpop.f32.mrb[0].mxu0
        %v738 = vadd.f32 0.0, %v737
        %v739 = vpop.f32.mrb[0].mxu0
        %740 = vdwg.mxu0
        %v741 = vadd.f32 %v684, %v735
        %v742 = vadd.f32 %v687, %v738
        %743 = vset.pattern.permute.xlu0 1
        %744 = vperm.xlu0 %743, %v273
        %v745 = vpop.permute.xlu0 %744
        %747 = vset.pattern.permute.xlu0 1
        %748 = vperm.xlu0 %747, %v274
        %v749 = vpop.permute.xlu0 %748
        %v751 = vadd.f32 %v741, %v745
        %v752 = vadd.f32 %v742, %v749
        %v753 = vmax.f32 %v751, 0.0
        %v754 = vmax.f32 %v752, 0.0
        %v755 = vpack.c.bf16 %v754, %v753
        %v758 = vunpack.c.l.b16 %v251
        %v759 = vunpack.c.l.b16 %v252
        %v760 = vpack.c.b16 %v759, %v758
        %vm761 = vcmask 121856
        %v763 = vsel %vm761, %v755, 0
        %vm765 = vcmask 1046528
        %vm766 = vcmask 1047552
        %v767 = vsel %vm765, 4294967295, 65535
        %v768 = vsel %vm766, %v767, 0
        %v770 = vand.u32 %v760, %v768
        %772 = vmatprep.subr.bf16.mxu0 0
        %773 = vmatpush1.bf16.msra.mxu0 %v770
        %774 = vmatprep.subr.bf16.mxu0 0
        %775 = vmatpush1.bf16.msra.mxu0 0
        %776 = vmatprep.subr.bf16.mxu0 0
        %777 = vmatpush1.bf16.msra.mxu0 0
        %778 = vmatprep.subr.bf16.mxu0 0
        %779 = vmatpush1.bf16.msra.mxu0 0
        %780 = vmatprep.subr.bf16.mxu0 0
        %781 = vmatpush1.bf16.msra.mxu0 0
        %782 = vmatprep.subr.bf16.mxu0 0
        %783 = vmatpush1.bf16.msra.mxu0 0
        %784 = vmatprep.subr.bf16.mxu0 0
        %785 = vmatpush1.bf16.msra.mxu0 0
        %786 = vmatprep.subr.bf16.mxu0 0
        %787 = vmatpush1.bf16.msra.mxu0 0
        %788 = vmatprep.subr.bf16.mxu0 0
        %789 = vmatpush1.bf16.msra.mxu0 0
        %790 = vmatprep.subr.bf16.mxu0 0
        %791 = vmatpush1.bf16.msra.mxu0 0
        %792 = vmatprep.subr.bf16.mxu0 0
        %793 = vmatpush1.bf16.msra.mxu0 0
        %794 = vmatprep.subr.bf16.mxu0 0
        %795 = vmatpush1.bf16.msra.mxu0 0
        %796 = vmatprep.subr.bf16.mxu0 0
        %797 = vmatpush1.bf16.msra.mxu0 0
        %798 = vmatprep.subr.bf16.mxu0 0
        %799 = vmatpush1.bf16.msra.mxu0 0
        %800 = vmatprep.subr.bf16.mxu0 0
        %801 = vmatpush1.bf16.msra.mxu0 0
        %802 = vmatprep.subr.bf16.mxu0 0
        %803 = vmatpush1.bf16.msra.mxu0 0
        %804 = vmatprep.mubr.bf16.mxu0 0
        %805 = vmatmul.mubr.bf16.gmra.mrb[0].mxu0 %v763
        %v806 = vpop.f32.mrb[0].mxu0
        %v807 = vadd.f32 0.0, %v806
        %v808 = vpop.f32.mrb[0].mxu0
        %v809 = vpop.f32.mrb[0].mxu0
        %v810 = vadd.f32 0.0, %v809
        %v811 = vpop.f32.mrb[0].mxu0
        %812 = vdwg.mxu0
        %v815 = vunpack.c.l.b16 %v249
        %v816 = vunpack.c.l.b16 %v250
        %v817 = vpack.c.b16 %v816, %v815
        %v820 = vsel %vm365, %v587, 0
        %822 = vmatprep.subr.bf16.mxu0 0
        %823 = vmatpush1.bf16.msra.mxu0 %v817
        %824 = vmatprep.subr.bf16.mxu0 0
        %825 = vmatpush1.bf16.msra.mxu0 0
        %826 = vmatprep.subr.bf16.mxu0 0
        %827 = vmatpush1.bf16.msra.mxu0 0
        %828 = vmatprep.subr.bf16.mxu0 0
        %829 = vmatpush1.bf16.msra.mxu0 0
        %830 = vmatprep.subr.bf16.mxu0 0
        %831 = vmatpush1.bf16.msra.mxu0 0
        %832 = vmatprep.subr.bf16.mxu0 0
        %833 = vmatpush1.bf16.msra.mxu0 0
        %834 = vmatprep.subr.bf16.mxu0 0
        %835 = vmatpush1.bf16.msra.mxu0 0
        %836 = vmatprep.subr.bf16.mxu0 0
        %837 = vmatpush1.bf16.msra.mxu0 0
        %838 = vmatprep.subr.bf16.mxu0 0
        %839 = vmatpush1.bf16.msra.mxu0 0
        %840 = vmatprep.subr.bf16.mxu0 0
        %841 = vmatpush1.bf16.msra.mxu0 0
        %842 = vmatprep.subr.bf16.mxu0 0
        %843 = vmatpush1.bf16.msra.mxu0 0
        %844 = vmatprep.subr.bf16.mxu0 0
        %845 = vmatpush1.bf16.msra.mxu0 0
        %846 = vmatprep.subr.bf16.mxu0 0
        %847 = vmatpush1.bf16.msra.mxu0 0
        %848 = vmatprep.subr.bf16.mxu0 0
        %849 = vmatpush1.bf16.msra.mxu0 0
        %850 = vmatprep.subr.bf16.mxu0 0
        %851 = vmatpush1.bf16.msra.mxu0 0
        %852 = vmatprep.subr.bf16.mxu0 0
        %853 = vmatpush1.bf16.msra.mxu0 0
        %854 = vmatprep.mubr.bf16.mxu0 0
        %855 = vmatmul.mubr.bf16.gmra.mrb[0].mxu0 %v820
        %v856 = vpop.f32.mrb[0].mxu0
        %v857 = vadd.f32 %v807, %v856
        %v858 = vpop.f32.mrb[0].mxu0
        %v859 = vpop.f32.mrb[0].mxu0
        %v860 = vadd.f32 %v810, %v859
        %v861 = vpop.f32.mrb[0].mxu0
        %862 = vdwg.mxu0
        %863 = vrot.lane.b32.xlu0 %v418, 44
        %v864 = vpop.permute.xlu0 %863
        %865 = vrot.lane.b32.xlu0 %v412, 20
        %v866 = vpop.permute.xlu0 %865
        %v868 = vsel %vm424, %v864, 0
        %v871 = vsel %vm428, %v866, 0
        %873 = vmatprep.subr.bf16.mxu0 0
        %874 = vmatpush1.bf16.msra.mxu0 %v871
        %875 = vmatprep.subr.bf16.mxu0 0
        %876 = vmatpush1.bf16.msra.mxu0 0
        %877 = vmatprep.subr.bf16.mxu0 0
        %878 = vmatpush1.bf16.msra.mxu0 0
        %879 = vmatprep.subr.bf16.mxu0 0
        %880 = vmatpush1.bf16.msra.mxu0 0
        %881 = vmatprep.subr.bf16.mxu0 0
        %882 = vmatpush1.bf16.msra.mxu0 0
        %883 = vmatprep.subr.bf16.mxu0 0
        %884 = vmatpush1.bf16.msra.mxu0 0
        %885 = vmatprep.subr.bf16.mxu0 0
        %886 = vmatpush1.bf16.msra.mxu0 0
        %887 = vmatprep.subr.bf16.mxu0 0
        %888 = vmatpush1.bf16.msra.mxu0 0
        %889 = vmatprep.subr.bf16.mxu0 0
        %890 = vmatpush1.bf16.msra.mxu0 0
        %891 = vmatprep.subr.bf16.mxu0 0
        %892 = vmatpush1.bf16.msra.mxu0 0
        %893 = vmatprep.subr.bf16.mxu0 0
        %894 = vmatpush1.bf16.msra.mxu0 0
        %895 = vmatprep.subr.bf16.mxu0 0
        %896 = vmatpush1.bf16.msra.mxu0 0
        %897 = vmatprep.subr.bf16.mxu0 0
        %898 = vmatpush1.bf16.msra.mxu0 0
        %899 = vmatprep.subr.bf16.mxu0 0
        %900 = vmatpush1.bf16.msra.mxu0 0
        %901 = vmatprep.subr.bf16.mxu0 0
        %902 = vmatpush1.bf16.msra.mxu0 0
        %903 = vmatprep.subr.bf16.mxu0 0
        %904 = vmatpush1.bf16.msra.mxu0 0
        %905 = vmatprep.mubr.bf16.mxu0 0
        %906 = vmatmul.mubr.bf16.gmra.mrb[0].mxu0 %v868
        %v907 = vpop.f32.mrb[0].mxu0
        %v908 = vadd.f32 0.0, %v907
        %v909 = vpop.f32.mrb[0].mxu0
        %v910 = vpop.f32.mrb[0].mxu0
        %v911 = vadd.f32 0.0, %v910
        %v912 = vpop.f32.mrb[0].mxu0
        %913 = vdwg.mxu0
        %914 = vrot.lane.b32.xlu0 %v418, 56
        %v915 = vpop.permute.xlu0 %914
        %916 = vrot.lane.b32.xlu0 %v412, 35
        %v917 = vpop.permute.xlu0 %916
        %v919 = vsel %vm424, %v915, 0
        %v922 = vsel %vm428, %v917, 0
        %924 = vmatprep.subr.bf16.mxu0 0
        %925 = vmatpush1.bf16.msra.mxu0 %v922
        %926 = vmatprep.subr.bf16.mxu0 0
        %927 = vmatpush1.bf16.msra.mxu0 0
        %928 = vmatprep.subr.bf16.mxu0 0
        %929 = vmatpush1.bf16.msra.mxu0 0
        %930 = vmatprep.subr.bf16.mxu0 0
        %931 = vmatpush1.bf16.msra.mxu0 0
        %932 = vmatprep.subr.bf16.mxu0 0
        %933 = vmatpush1.bf16.msra.mxu0 0
        %934 = vmatprep.subr.bf16.mxu0 0
        %935 = vmatpush1.bf16.msra.mxu0 0
        %936 = vmatprep.subr.bf16.mxu0 0
        %937 = vmatpush1.bf16.msra.mxu0 0
        %938 = vmatprep.subr.bf16.mxu0 0
        %939 = vmatpush1.bf16.msra.mxu0 0
        %940 = vmatprep.subr.bf16.mxu0 0
        %941 = vmatpush1.bf16.msra.mxu0 0
        %942 = vmatprep.subr.bf16.mxu0 0
        %943 = vmatpush1.bf16.msra.mxu0 0
        %944 = vmatprep.subr.bf16.mxu0 0
        %945 = vmatpush1.bf16.msra.mxu0 0
        %946 = vmatprep.subr.bf16.mxu0 0
        %947 = vmatpush1.bf16.msra.mxu0 0
        %948 = vmatprep.subr.bf16.mxu0 0
        %949 = vmatpush1.bf16.msra.mxu0 0
        %950 = vmatprep.subr.bf16.mxu0 0
        %951 = vmatpush1.bf16.msra.mxu0 0
        %952 = vmatprep.subr.bf16.mxu0 0
        %953 = vmatpush1.bf16.msra.mxu0 0
        %954 = vmatprep.subr.bf16.mxu0 0
        %955 = vmatpush1.bf16.msra.mxu0 0
        %956 = vmatprep.mubr.bf16.mxu0 0
        %957 = vmatmul.mubr.bf16.gmra.mrb[0].mxu0 %v919
        %v958 = vpop.f32.mrb[0].mxu0
        %v959 = vadd.f32 %v908, %v958
        %v960 = vpop.f32.mrb[0].mxu0
        %v961 = vpop.f32.mrb[0].mxu0
        %v962 = vadd.f32 %v911, %v961
        %v963 = vpop.f32.mrb[0].mxu0
        %964 = vdwg.mxu0
        %965 = vrot.lane.b32.xlu0 %v418, 32
        %v966 = vpop.permute.xlu0 %965
        %968 = vrot.lane.b32.xlu0 %v412, 5
        %v969 = vpop.permute.xlu0 %968
        %970 = vrot.lane.b32.xlu0 %v413, 5
        %v971 = vpop.permute.xlu0 %970
        %vm972 = vcmask 39936
        %v973 = vsel %vm972, %v969, %v971
        %v975 = vsel %vm424, %v966, 0
        %v978 = vsel %vm428, %v973, 0
        %980 = vmatprep.subr.bf16.mxu0 0
        %981 = vmatpush1.bf16.msra.mxu0 %v978
        %982 = vmatprep.subr.bf16.mxu0 0
        %983 = vmatpush1.bf16.msra.mxu0 0
        %984 = vmatprep.subr.bf16.mxu0 0
        %985 = vmatpush1.bf16.msra.mxu0 0
        %986 = vmatprep.subr.bf16.mxu0 0
        %987 = vmatpush1.bf16.msra.mxu0 0
        %988 = vmatprep.subr.bf16.mxu0 0
        %989 = vmatpush1.bf16.msra.mxu0 0
        %990 = vmatprep.subr.bf16.mxu0 0
        %991 = vmatpush1.bf16.msra.mxu0 0
        %992 = vmatprep.subr.bf16.mxu0 0
        %993 = vmatpush1.bf16.msra.mxu0 0
        %994 = vmatprep.subr.bf16.mxu0 0
        %995 = vmatpush1.bf16.msra.mxu0 0
        %996 = vmatprep.subr.bf16.mxu0 0
        %997 = vmatpush1.bf16.msra.mxu0 0
        %998 = vmatprep.subr.bf16.mxu0 0
        %999 = vmatpush1.bf16.msra.mxu0 0
        %1000 = vmatprep.subr.bf16.mxu0 0
        %1001 = vmatpush1.bf16.msra.mxu0 0
        %1002 = vmatprep.subr.bf16.mxu0 0
        %1003 = vmatpush1.bf16.msra.mxu0 0
        %1004 = vmatprep.subr.bf16.mxu0 0
        %1005 = vmatpush1.bf16.msra.mxu0 0
        %1006 = vmatprep.subr.bf16.mxu0 0
        %1007 = vmatpush1.bf16.msra.mxu0 0
        %1008 = vmatprep.subr.bf16.mxu0 0
        %1009 = vmatpush1.bf16.msra.mxu0 0
        %1010 = vmatprep.subr.bf16.mxu0 0
        %1011 = vmatpush1.bf16.msra.mxu0 0
        %1012 = vmatprep.mubr.bf16.mxu0 0
        %1013 = vmatmul.mubr.bf16.gmra.mrb[0].mxu0 %v975
        %v1014 = vpop.f32.mrb[0].mxu0
        %v1015 = vadd.f32 0.0, %v1014
        %v1016 = vpop.f32.mrb[0].mxu0
        %v1017 = vpop.f32.mrb[0].mxu0
        %v1018 = vadd.f32 0.0, %v1017
        %v1019 = vpop.f32.mrb[0].mxu0
        %1020 = vdwg.mxu0
        %v1021 = vadd.f32 %v959, %v1015
        %v1022 = vadd.f32 %v962, %v1018
        %1023 = vset.pattern.permute.xlu0 2
        %1024 = vperm.xlu0 %1023, %v273
        %v1025 = vpop.permute.xlu0 %1024
        %1027 = vset.pattern.permute.xlu0 2
        %1028 = vperm.xlu0 %1027, %v274
        %v1029 = vpop.permute.xlu0 %1028
        %v1031 = vadd.f32 %v1021, %v1025
        %v1032 = vadd.f32 %v1022, %v1029
        %v1033 = vmax.f32 %v1031, 0.0
        %v1034 = vmax.f32 %v1032, 0.0
        %v1035 = vpack.c.bf16 %v1034, %v1033
        %v1038 = vunpack.c.l.b16 %v253
        %v1039 = vunpack.c.l.b16 %v254
        %v1040 = vpack.c.b16 %v1038, %v759
        %v1041 = vpack.c.b16 %v1039, %v1039
        %vm1042 = vsmask.f32 4352
        %v1044 = vshrl.u32 %v1040, 16
        %v1046 = vrot.slane %v1044, 3
        %v1047 = vshll.u32 %v1040, 16
        %v1049 = vrot.slane %v1047, 4
        %v1050 = vor.u32 %v1046, %v1049
        %v1052 = vshrl.u32 %v1041, 16
        %v1054 = vrot.slane %v1052, 3
        %v1055 = vshll.u32 %v1041, 16
        %v1057 = vrot.slane %v1055, 4
        %v1058 = vor.u32 %v1054, %v1057
        %v1059 = vsel %vm1042, %v1050, %v1058
        %v1061 = vsel %vm761, %v1035, 0
        %v1064 = vand.u32 %v1059, %v768
        %1066 = vmatprep.subr.bf16.mxu0 0
        %1067 = vmatpush1.bf16.msra.mxu0 %v1064
        %1068 = vmatprep.subr.bf16.mxu0 0
        %1069 = vmatpush1.bf16.msra.mxu0 0
        %1070 = vmatprep.subr.bf16.mxu0 0
        %1071 = vmatpush1.bf16.msra.mxu0 0
        %1072 = vmatprep.subr.bf16.mxu0 0
        %1073 = vmatpush1.bf16.msra.mxu0 0
        %1074 = vmatprep.subr.bf16.mxu0 0
        %1075 = vmatpush1.bf16.msra.mxu0 0
        %1076 = vmatprep.subr.bf16.mxu0 0
        %1077 = vmatpush1.bf16.msra.mxu0 0
        %1078 = vmatprep.subr.bf16.mxu0 0
        %1079 = vmatpush1.bf16.msra.mxu0 0
        %1080 = vmatprep.subr.bf16.mxu0 0
        %1081 = vmatpush1.bf16.msra.mxu0 0
        %1082 = vmatprep.subr.bf16.mxu0 0
        %1083 = vmatpush1.bf16.msra.mxu0 0
        %1084 = vmatprep.subr.bf16.mxu0 0
        %1085 = vmatpush1.bf16.msra.mxu0 0
        %1086 = vmatprep.subr.bf16.mxu0 0
        %1087 = vmatpush1.bf16.msra.mxu0 0
        %1088 = vmatprep.subr.bf16.mxu0 0
        %1089 = vmatpush1.bf16.msra.mxu0 0
        %1090 = vmatprep.subr.bf16.mxu0 0
        %1091 = vmatpush1.bf16.msra.mxu0 0
        %1092 = vmatprep.subr.bf16.mxu0 0
        %1093 = vmatpush1.bf16.msra.mxu0 0
        %1094 = vmatprep.subr.bf16.mxu0 0
        %1095 = vmatpush1.bf16.msra.mxu0 0
        %1096 = vmatprep.subr.bf16.mxu0 0
        %1097 = vmatpush1.bf16.msra.mxu0 0
        %1098 = vmatprep.mubr.bf16.mxu0 0
        %1099 = vmatmul.mubr.bf16.gmra.mrb[0].mxu0 %v1061
        %v1100 = vpop.f32.mrb[0].mxu0
        %v1101 = vadd.f32 0.0, %v1100
        %v1102 = vpop.f32.mrb[0].mxu0
        %v1103 = vpop.f32.mrb[0].mxu0
        %v1104 = vadd.f32 0.0, %v1103
        %v1105 = vpop.f32.mrb[0].mxu0
        %1106 = vdwg.mxu0
        %v1107 = vadd.f32 %v857, %v1101
        %v1108 = vadd.f32 %v860, %v1104
        %1109 = vset.pattern.permute.xlu0 3
        %1110 = vperm.xlu0 %1109, %v273
        %v1111 = vpop.permute.xlu0 %1110
        %1113 = vset.pattern.permute.xlu0 3
        %1114 = vperm.xlu0 %1113, %v274
        %v1115 = vpop.permute.xlu0 %1114
        %1117 = vrot.lane.b32.xlu0 %v418, 20
        %v1118 = vpop.permute.xlu0 %1117
        %1119 = vrot.lane.b32.xlu0 %v413, 118
        %v1120 = vpop.permute.xlu0 %1119
        %v1122 = vsel %vm424, %v1118, 0
        %v1125 = vsel %vm428, %v1120, 0
        %1127 = vmatprep.subr.bf16.mxu0 0
        %1128 = vmatpush1.bf16.msra.mxu0 %v1125
        %1129 = vmatprep.subr.bf16.mxu0 0
        %1130 = vmatpush1.bf16.msra.mxu0 0
        %1131 = vmatprep.subr.bf16.mxu0 0
        %1132 = vmatpush1.bf16.msra.mxu0 0
        %1133 = vmatprep.subr.bf16.mxu0 0
        %1134 = vmatpush1.bf16.msra.mxu0 0
        %1135 = vmatprep.subr.bf16.mxu0 0
        %1136 = vmatpush1.bf16.msra.mxu0 0
        %1137 = vmatprep.subr.bf16.mxu0 0
        %1138 = vmatpush1.bf16.msra.mxu0 0
        %1139 = vmatprep.subr.bf16.mxu0 0
        %1140 = vmatpush1.bf16.msra.mxu0 0
        %1141 = vmatprep.subr.bf16.mxu0 0
        %1142 = vmatpush1.bf16.msra.mxu0 0
        %1143 = vmatprep.subr.bf16.mxu0 0
        %1144 = vmatpush1.bf16.msra.mxu0 0
        %1145 = vmatprep.subr.bf16.mxu0 0
        %1146 = vmatpush1.bf16.msra.mxu0 0
        %1147 = vmatprep.subr.bf16.mxu0 0
        %1148 = vmatpush1.bf16.msra.mxu0 0
        %1149 = vmatprep.subr.bf16.mxu0 0
        %1150 = vmatpush1.bf16.msra.mxu0 0
        %1151 = vmatprep.subr.bf16.mxu0 0
        %1152 = vmatpush1.bf16.msra.mxu0 0
        %1153 = vmatprep.subr.bf16.mxu0 0
        %1154 = vmatpush1.bf16.msra.mxu0 0
        %1155 = vmatprep.subr.bf16.mxu0 0
        %1156 = vmatpush1.bf16.msra.mxu0 0
        %1157 = vmatprep.subr.bf16.mxu0 0
        %1158 = vmatpush1.bf16.msra.mxu0 0
        %1159 = vmatprep.mubr.bf16.mxu0 0
        %1160 = vmatmul.mubr.bf16.gmra.mrb[0].mxu0 %v1122
        %v1161 = vpop.f32.mrb[0].mxu0
        %v1162 = vadd.f32 %v1111, %v1161
        %v1163 = vpop.f32.mrb[0].mxu0
        %v1164 = vpop.f32.mrb[0].mxu0
        %v1165 = vadd.f32 %v1115, %v1164
        %v1166 = vpop.f32.mrb[0].mxu0
        %1167 = vdwg.mxu0
        %v1168 = vmax.f32 %v1162, 0.0
        %v1169 = vmax.f32 %v1165, 0.0
        %v1170 = vpack.c.bf16 %v1169, %v1168
        %v1173 = vunpack.c.l.b16 %v255
        %v1174 = vunpack.c.l.b16 %v256
        %v1175 = vpack.c.b16 %v1173, %v1039
        %v1176 = vpack.c.b16 %v1174, %v1174
        %vm1177 = vcmask 1044480
        %v1178 = vrot.slane %v1175, 3
        %v1179 = vrot.slane %v1176, 3
        %v1180 = vsel %vm1177, %v1178, %v1179
        %v1183 = vsel %vm365, %v1170, 0
        %1185 = vmatprep.subr.bf16.mxu0 0
        %1186 = vmatpush1.bf16.msra.mxu0 %v1180
        %1187 = vmatprep.subr.bf16.mxu0 0
        %1188 = vmatpush1.bf16.msra.mxu0 0
        %1189 = vmatprep.subr.bf16.mxu0 0
        %1190 = vmatpush1.bf16.msra.mxu0 0
        %1191 = vmatprep.subr.bf16.mxu0 0
        %1192 = vmatpush1.bf16.msra.mxu0 0
        %1193 = vmatprep.subr.bf16.mxu0 0
        %1194 = vmatpush1.bf16.msra.mxu0 0
        %1195 = vmatprep.subr.bf16.mxu0 0
        %1196 = vmatpush1.bf16.msra.mxu0 0
        %1197 = vmatprep.subr.bf16.mxu0 0
        %1198 = vmatpush1.bf16.msra.mxu0 0
        %1199 = vmatprep.subr.bf16.mxu0 0
        %1200 = vmatpush1.bf16.msra.mxu0 0
        %1201 = vmatprep.subr.bf16.mxu0 0
        %1202 = vmatpush1.bf16.msra.mxu0 0
        %1203 = vmatprep.subr.bf16.mxu0 0
        %1204 = vmatpush1.bf16.msra.mxu0 0
        %1205 = vmatprep.subr.bf16.mxu0 0
        %1206 = vmatpush1.bf16.msra.mxu0 0
        %1207 = vmatprep.subr.bf16.mxu0 0
        %1208 = vmatpush1.bf16.msra.mxu0 0
        %1209 = vmatprep.subr.bf16.mxu0 0
        %1210 = vmatpush1.bf16.msra.mxu0 0
        %1211 = vmatprep.subr.bf16.mxu0 0
        %1212 = vmatpush1.bf16.msra.mxu0 0
        %1213 = vmatprep.subr.bf16.mxu0 0
        %1214 = vmatpush1.bf16.msra.mxu0 0
        %1215 = vmatprep.subr.bf16.mxu0 0
        %1216 = vmatpush1.bf16.msra.mxu0 0
        %1217 = vmatprep.mubr.bf16.mxu0 0
        %1218 = vmatmul.mubr.bf16.gmra.mrb[0].mxu0 %v1183
        %v1219 = vpop.f32.mrb[0].mxu0
        %v1220 = vadd.f32 0.0, %v1219
        %v1221 = vpop.f32.mrb[0].mxu0
        %v1222 = vpop.f32.mrb[0].mxu0
        %v1223 = vadd.f32 0.0, %v1222
        %v1224 = vpop.f32.mrb[0].mxu0
        %1225 = vdwg.mxu0
        %v1226 = vadd.f32 %v1107, %v1220
        %v1227 = vadd.f32 %v1108, %v1223
        %v1228 = vpack.c.bf16 %v1227, %v1226
        %v1237 = vunpack.c.l.b16 %v257
        %v1238 = vunpack.c.l.b16 %v258
        %v1239 = vunpack.c.l.b16 %v259
        %v1240 = vunpack.c.l.b16 %v260
        %v1241 = vunpack.c.l.b16 %v261
        %v1242 = vunpack.c.l.b16 %v262
        %v1243 = vunpack.c.l.b16 %v263
        %v1244 = vunpack.c.l.b16 %v264
        %v1245 = vpack.c.b16 %v1238, %v1237
        %v1246 = vpack.c.b16 %v1240, %v1239
        %v1247 = vpack.c.b16 %v1242, %v1241
        %v1248 = vpack.c.b16 %v1244, %v1243
        %vm1253 = vcmask 523264
        %v1255 = vsel %vm1253, %v1228, 0
        %1257 = vmatprep.subr.bf16.mxu0 0
        %1258 = vmatpush1.bf16.msra.mxu0 %v1245
        %1259 = vmatprep.subr.bf16.mxu0 0
        %1260 = vmatpush1.bf16.msra.mxu0 %v1246
        %1261 = vmatprep.subr.bf16.mxu0 0
        %1262 = vmatpush1.bf16.msra.mxu0 %v1247
        %1263 = vmatprep.subr.bf16.mxu0 0
        %1264 = vmatpush1.bf16.msra.mxu0 %v1248
        %1265 = vmatprep.subr.bf16.mxu0 0
        %1266 = vmatpush1.bf16.msra.mxu0 0
        %1267 = vmatprep.subr.bf16.mxu0 0
        %1268 = vmatpush1.bf16.msra.mxu0 0
        %1269 = vmatprep.subr.bf16.mxu0 0
        %1270 = vmatpush1.bf16.msra.mxu0 0
        %1271 = vmatprep.subr.bf16.mxu0 0
        %1272 = vmatpush1.bf16.msra.mxu0 0
        %1273 = vmatprep.subr.bf16.mxu0 0
        %1274 = vmatpush1.bf16.msra.mxu0 0
        %1275 = vmatprep.subr.bf16.mxu0 0
        %1276 = vmatpush1.bf16.msra.mxu0 0
        %1277 = vmatprep.subr.bf16.mxu0 0
        %1278 = vmatpush1.bf16.msra.mxu0 0
        %1279 = vmatprep.subr.bf16.mxu0 0
        %1280 = vmatpush1.bf16.msra.mxu0 0
        %1281 = vmatprep.subr.bf16.mxu0 0
        %1282 = vmatpush1.bf16.msra.mxu0 0
        %1283 = vmatprep.subr.bf16.mxu0 0
        %1284 = vmatpush1.bf16.msra.mxu0 0
        %1285 = vmatprep.subr.bf16.mxu0 0
        %1286 = vmatpush1.bf16.msra.mxu0 0
        %1287 = vmatprep.subr.bf16.mxu0 0
        %1288 = vmatpush1.bf16.msra.mxu0 0
        %1289 = vmatprep.mubr.bf16.mxu0 0
        %1290 = vmatmul.mubr.bf16.gmra.mrb[0].mxu0 %v1255
        %v1291 = vpop.f32.mrb[0].mxu0
        %v1292 = vadd.f32 0.0, %v1291
        %v1293 = vpop.f32.mrb[0].mxu0
        %v1294 = vpop.f32.mrb[0].mxu0
        %v1295 = vadd.f32 0.0, %v1294
        %v1296 = vpop.f32.mrb[0].mxu0
        %1297 = vdwg.mxu0
        %1299 = vset.pattern.permute.xlu0 0
        %1300 = vperm.xlu0 %1299, %v275
        %v1301 = vpop.permute.xlu0 %1300
        %1304 = vset.pattern.permute.xlu0 0
        %1305 = vperm.xlu0 %1304, %v276
        %v1306 = vpop.permute.xlu0 %1305
        %v1308 = vmul.f32 %v1292, %v1301
        %v1309 = vmul.f32 %v1295, %v1306
        %1310 = vset.pattern.permute.xlu0 1
        %1311 = vperm.xlu0 %1310, %v275
        %v1312 = vpop.permute.xlu0 %1311
        %1314 = vset.pattern.permute.xlu0 1
        %1315 = vperm.xlu0 %1314, %v276
        %v1316 = vpop.permute.xlu0 %1315
        %v1318 = vmul.f32 %v1292, %v1312
        %v1319 = vmul.f32 %v1295, %v1316
        %1322 = vrot.lane.b32.xlu0 %v1318, 96
        %v1323 = vpop.permute.xlu0 %1322
        %1324 = vrot.lane.b32.xlu0 %v1319, 96
        %v1325 = vpop.permute.xlu0 %1324
        %v1328 = vadd.f32 %v1308, %v1323
        %v1329 = vadd.f32 %v1309, %v1325
        %1330 = vset.pattern.permute.xlu0 2
        %1331 = vperm.xlu0 %1330, %v275
        %v1332 = vpop.permute.xlu0 %1331
        %1334 = vset.pattern.permute.xlu0 2
        %1335 = vperm.xlu0 %1334, %v276
        %v1336 = vpop.permute.xlu0 %1335
        %v1338 = vmul.f32 %v1292, %v1332
        %v1339 = vmul.f32 %v1295, %v1336
        %1342 = vrot.lane.b32.xlu0 %v1338, 64
        %v1343 = vpop.permute.xlu0 %1342
        %1344 = vrot.lane.b32.xlu0 %v1339, 64
        %v1345 = vpop.permute.xlu0 %1344
        %v1348 = vadd.f32 %v1328, %v1343
        %v1349 = vadd.f32 %v1329, %v1345
        %v1350 = vadd.f32 %v1348, %v267
        %v1351 = vadd.f32 %v1349, %v268
        %v1352 = vmax.f32 %v1350, 0.0
        %v1353 = vmax.f32 %v1351, 0.0
        %v1354 = vsel %vm311, %v1352, 0.0
        %1355 = vadd.xlane.f32.xlu0 %v1354
        %v1356 = vpop.xlane.xlu0 %1355
        %vm1357 = vcmask 257024
        %v1358 = vsel %vm1357, %v1353, 0.0
        %1359 = vadd.xlane.f32.xlu0 %v1358
        %v1360 = vpop.xlane.xlu0 %1359
        %v1361 = vrcp.pop 32.0
        %v1362 = vmul.f32 %v1356, %v1361
        %v1363 = vmul.f32 %v1360, %v1361
        %v1364 = vsub.f32 %v1352, %v1362
        %v1365 = vsub.f32 %v1353, %v1363
        %v1366 = vmul.f32 %v1364, %v1364
        %v1367 = vmul.f32 %v1365, %v1365
        %v1368 = vsel %vm311, %v1366, 0.0
        %1369 = vadd.xlane.f32.xlu0 %v1368
        %v1370 = vpop.xlane.xlu0 %1369
        %v1371 = vsel %vm1357, %v1367, 0.0
        %1372 = vadd.xlane.f32.xlu0 %v1371
        %v1373 = vpop.xlane.xlu0 %1372
        %v1374 = vmul.f32 %v1370, %v1361
        %v1375 = vmul.f32 %v1373, %v1361
        %v1376 = vadd.f32 %v1374, 1e-05
        %v1377 = vadd.f32 %v1375, 1e-05
        %v1378 = vrsqrt.pop %v1376
        %v1379 = vrsqrt.pop %v1377
        %v1380 = vmul.f32 %v1364, %v1378
        %v1381 = vmul.f32 %v1365, %v1379
        %v1382 = vmul.f32 %v1380, %v269
        %v1383 = vmul.f32 %v1381, %v270
        %v1384 = vadd.f32 %v1382, %v271
        %v1385 = vadd.f32 %v1383, %v272
        %v1386 = vpack.c.bf16 %v1385, %v1384
        %v1389 = vunpack.c.l.b16 %v265
        %v1390 = vunpack.c.l.b16 %v266
        %v1391 = vpack.c.b16 %v1390, %v1389
        %v1393 = vsel %vm424, %v1391, 0
        %v1396 = vsel %vm428, %v1386, 0
        %1398 = vmatprep.subr.bf16.mxu0 0
        %1399 = vmatpush1.bf16.msra.mxu0 %v1396
        %1400 = vmatprep.subr.bf16.mxu0 0
        %1401 = vmatpush1.bf16.msra.mxu0 0
        %1402 = vmatprep.subr.bf16.mxu0 0
        %1403 = vmatpush1.bf16.msra.mxu0 0
        %1404 = vmatprep.subr.bf16.mxu0 0
        %1405 = vmatpush1.bf16.msra.mxu0 0
        %1406 = vmatprep.subr.bf16.mxu0 0
        %1407 = vmatpush1.bf16.msra.mxu0 0
        %1408 = vmatprep.subr.bf16.mxu0 0
        %1409 = vmatpush1.bf16.msra.mxu0 0
        %1410 = vmatprep.subr.bf16.mxu0 0
        %1411 = vmatpush1.bf16.msra.mxu0 0
        %1412 = vmatprep.subr.bf16.mxu0 0
        %1413 = vmatpush1.bf16.msra.mxu0 0
        %1414 = vmatprep.subr.bf16.mxu0 0
        %1415 = vmatpush1.bf16.msra.mxu0 0
        %1416 = vmatprep.subr.bf16.mxu0 0
        %1417 = vmatpush1.bf16.msra.mxu0 0
        %1418 = vmatprep.subr.bf16.mxu0 0
        %1419 = vmatpush1.bf16.msra.mxu0 0
        %1420 = vmatprep.subr.bf16.mxu0 0
        %1421 = vmatpush1.bf16.msra.mxu0 0
        %1422 = vmatprep.subr.bf16.mxu0 0
        %1423 = vmatpush1.bf16.msra.mxu0 0
        %1424 = vmatprep.subr.bf16.mxu0 0
        %1425 = vmatpush1.bf16.msra.mxu0 0
        %1426 = vmatprep.subr.bf16.mxu0 0
        %1427 = vmatpush1.bf16.msra.mxu0 0
        %1428 = vmatprep.subr.bf16.mxu0 0
        %1429 = vmatpush1.bf16.msra.mxu0 0
        %1430 = vmatprep.mubr.bf16.mxu0 0
        %1431 = vmatmul.mubr.bf16.gmra.mrb[0].mxu0 %v1393
        %v1432 = vpop.f32.mrb[0].mxu0
        %v1433 = vadd.f32 0.0, %v1432
        %v1434 = vpop.f32.mrb[0].mxu0
        %v1435 = vpop.f32.mrb[0].mxu0
        %v1436 = vadd.f32 0.0, %v1435
        %v1437 = vpop.f32.mrb[0].mxu0
        %1438 = vdwg.mxu0
        %v1439 = vadd.f32 %v239, %v1433
        %v1440 = vadd.f32 %v240, %v1436
        %1441 = vst.msk [vmem:[#allocation8] sm:$0xff] %vm311, %v1439
        %1442 = vst.msk [vmem:[#allocation8 + $0x8] sm:$0xff] %vm311, %v1440
        // Predicated region
        $region49: #{forward.1} parent=31 // pred_check
          %p1443 = pneg %p105
        $region50: #{forward.1} parent=31 // pred_check_branch
          %1445 = sbr.rel (%p1443) target = $region52
        $region51: #{forward.1} parent=31 // pred_region
          %s1447 = ssub.s32 256, 256
          %1448 = vsyncadd [#allocation4], %s1447
          %s1449 = sshll.u32 [#allocation8], 4
          %s1450 = int_to_ptr.vmem [resolvable:$true] %s1449
          %1455 = dma.vmem_to_hbm [thread:$0]  %s1450, 256, %s3, [#allocation4], 128, 128, 8
        $region52: #{forward.1} parent=31 // pred_fallthru
          _
        // Predicated region
        $region53: #{forward.1} parent=31 // pred_check
          %p1456 = pneg %p105
        $region54: #{forward.1} parent=31 // pred_check_branch
          %1458 = sbr.rel (%p1456) target = $region56
        $region55: #{forward.1} parent=31 // pred_region
          %1459 = dma.done [#allocation4], 256
        $region56: #{forward.1} parent=31 // pred_fallthru
          _
      $region32: #{forward.1} parent=5 // pred_fallthru
        _
      %p1460 = scmp.le.s32.totalorder 2, %s14
      // Predicated region
      $region57: #{forward.1} parent=5 // pred_check
        %p1461 = pneg %p1460
      $region58: #{forward.1} parent=5 // pred_check_branch
        %1463 = sbr.rel (%p1461) target = $region60
      $region59: #{forward.1} parent=5 // pred_region
        %s1464 = ssub.s32 %s14, 2
      $region60: #{forward.1} parent=5 // pred_fallthru
        _
    $region6: #{forward.1} parent=1 // loop_footer
      %s18 = sadd.s32 1, %s14
    $region7: #{forward.1} parent=1 // loop_footer_branch
      %13 = sbr.rel target = $region3
    $region8: #{forward.1} parent=1 // loop_exit
      _
    %1465 = vsyncpa [#allocation3], 1
    %s1466 = scalar_lea.sflag [#allocation3], 1
    %1467 = vsyncpa %s1466, 1
    %1468 = vsyncpa [#allocation6], 1
    %s1469 = scalar_lea.sflag [#allocation6], 1
    %1470 = vsyncpa %s1469, 1
    %1471 = vsyncpa [#allocation4], 1
    %s1472 = scalar_lea.sflag [#allocation4], 1
    %1473 = vsyncpa %s1472, 1

</llo_original>
